<compile_context>
chip_gen: v7x
topology: tpu7x:2x2x1
jax: 0.10.0
libtpu: 0.0.40
codegen_flags: <defaults>
</compile_context>

<pallas_src>
import functools

import jax
import jax.numpy as jnp
from jax.experimental import pallas as pl
from jax.experimental.pallas import tpu as pltpu


def _gaussian_1d(standard_deviation) -> jnp.ndarray:
    """1-D factor of the reference 2-D Gaussian (exact up to f32 rounding)."""
    std = int(standard_deviation)
    k = 4 * std + 1
    mean = k // 2
    d = jnp.arange(-mean, mean + 1, dtype=jnp.float32)
    g = jnp.exp(-0.5 * (d * d) / float(std ** 2))
    return g / jnp.sum(g)


def create_2d_gaussian_kernel(standard_deviation) -> jnp.ndarray:
    """Exact port of the PyTorch helper (including its slightly odd formula)."""
    std = int(standard_deviation)
    k = 4 * std + 1
    mean = k // 2
    d = jnp.arange(-mean, mean + 1, dtype=jnp.float32).reshape(-1, 1) ** 2
    k2d = d + d.T
    k2d = jnp.exp(-0.5 * (k2d - mean) / float(std ** 2))
    return k2d / jnp.sum(k2d)


def _banded_conv_matrix(n: int, g1d: jnp.ndarray) -> jnp.ndarray:
    """M such that M @ x == "same" 1-D correlation of x with g1d (zero pad).

    M[i, i'] = g1d[i' - i + pad] when 0 <= i' - i + pad < k, else 0.
    """
    k = g1d.shape[0]
    pad = k // 2
    idx = jnp.arange(n)
    d = idx[None, :] - idx[:, None] + pad          # tap index per (i, i')
    valid = (d >= 0) & (d < k)
    return jnp.where(valid, g1d[jnp.clip(d, 0, k - 1)], 0.0).astype(jnp.float32)


def _hybrid_kernel(a_ref, b_ref, x1_ref, x2_ref,
                   low_ref, high_ref, hyb_ref, *, pblk: int, H: int, W: int):
    """One grid step = `pblk` whole image planes, pre-flattened to (pblk*H, W)."""
    A = a_ref[...]                  # (H, H) row-direction banded Gaussian
    Bm = b_ref[...]                 # (W, W) column-direction banded Gaussian
    x1 = x1_ref[...]                # (pblk*H, W)
    x2 = x2_ref[...]

    # Column (W) direction conv: one big MXU matmul over all planes at once.
    y1 = jnp.dot(x1, Bm, preferred_element_type=jnp.float32)
    y2 = jnp.dot(x2, Bm, preferred_element_type=jnp.float32)

    # Row (H) direction conv: per-plane (H,H)@(H,W) MXU matmuls, unrolled.
    for p in range(pblk):
        r0, r1 = p * H, (p + 1) * H
        low = jnp.dot(A, y1[r0:r1, :], preferred_element_type=jnp.float32)
        blur2 = jnp.dot(A, y2[r0:r1, :], preferred_element_type=jnp.float32)
        high = x2[r0:r1, :] - blur2
        low_ref[r0:r1, :] = low
        high_ref[r0:r1, :] = high
        hyb_ref[r0:r1, :] = jnp.clip(low + high, 0.0, 1.0)


def _pick_pblk(P: int, H: int, W: int,
               max_planes: int = 8, budget_bytes: int = 12 << 20) -> int:
    """Planes per grid step: 2 inputs + 3 outputs, double-buffered, f32."""
    bytes_per_plane = 5 * 2 * H * W * 4
    cap = int(max(1, min(max_planes, budget_bytes // bytes_per_plane, P)))
    pblk = cap
    while P % pblk:
        pblk -= 1
    return pblk


def hybrid_image_forward(image1, image2, cutoff_standarddeviation):
    """Returns (low_frequencies, high_frequencies, hybrid_image), all NCHW f32."""
    B, C, H, W = image1.shape
    # Reference module's get_kernel hardcodes 3 replicated channels.
    assert C == 3, "HybridImageModel implicitly requires 3 input channels"

    g1d = _gaussian_1d(cutoff_standarddeviation)
    A = _banded_conv_matrix(H, g1d)          # (H, H) left  (row) conv matrix
    Bm = _banded_conv_matrix(W, g1d)         # (W, W) right (col) conv matrix

    P = B * C
    pblk = _pick_pblk(P, H, W)
    if (pblk * H) % 8 != 0:                  # (8,128)-rule guard on the block
        pblk = P

    # Free, contiguous reshapes in HBM: no padded copies are materialized.
    x1 = image1.astype(jnp.float32).reshape(P * H, W)
    x2 = image2.astype(jnp.float32).reshape(P * H, W)

    kern = functools.partial(_hybrid_kernel, pblk=pblk, H=H, W=W)
    rows = pblk * H
    grid = (P // pblk,)

    plane_spec = pl.BlockSpec((rows, W), lambda p: (p, 0))
    a_spec = pl.BlockSpec((H, H), lambda p: (0, 0))
    b_spec = pl.BlockSpec((W, W), lambda p: (0, 0))
    out_shape = tuple(
        jax.ShapeDtypeStruct((P * H, W), jnp.float32) for _ in range(3))

    low, high, hyb = pl.pallas_call(
        kern,
        out_shape=out_shape,
        grid=grid,
        in_specs=[a_spec, b_spec, plane_spec, plane_spec],
        out_specs=(plane_spec, plane_spec, plane_spec),
        compiler_params=pltpu.CompilerParams(
            dimension_semantics=("parallel",)),
    )(A, Bm, x1, x2)

    shape = (B, C, H, W)
    return low.reshape(shape), high.reshape(shape), hyb.reshape(shape)


def _reference_forward(image1, image2, cutoff_standarddeviation):
    """Pure-JAX reference (mirrors the PyTorch semantics) for verification."""
    w2d = create_2d_gaussian_kernel(cutoff_standarddeviation)
    k = int(w2d.shape[0])
    pad = k // 2

    def depthwise(x):
        xp = jnp.pad(x, ((0, 0), (0, 0), (pad, pad), (pad, pad)))
        H, W = x.shape[2], x.shape[3]
        acc = jnp.zeros_like(x)
        for i in range(k):
            for j in range(k):
                acc = acc + w2d[i, j] * xp[:, :, i:i + H, j:j + W]
        return acc

    low = depthwise(image1)
    high = image2 - depthwise(image2)
    hyb = jnp.clip(low + high, 0.0, 1.0)
    return low, high, hyb


if __name__ == "__main__":
    key = jax.random.PRNGKey(0)
    k1, k2 = jax.random.split(key)
    B, C, H, W = 2, 3, 16, 16            # small NCHW images in [0, 1]
    cutoff_std = 1                        # k = 4*std + 1 = 5

    image1 = jax.random.uniform(k1, (B, C, H, W), dtype=jnp.float32)
    image2 = jax.random.uniform(k2, (B, C, H, W), dtype=jnp.float32)

    low, high, hyb = hybrid_image_forward(image1, image2, cutoff_std)
    jax.block_until_ready((low, high, hyb))

    low_r, high_r, hyb_r = _reference_forward(image1, image2, cutoff_std)
    assert low.shape == (B, C, H, W) and high.shape == (B, C, H, W)
    assert hyb.shape == (B, C, H, W)
    assert jnp.allclose(low, low_r, atol=1e-5, rtol=1e-5)
    assert jnp.allclose(high, high_r, atol=1e-5, rtol=1e-5)
    assert jnp.allclose(hyb, hyb_r, atol=1e-5, rtol=1e-5)

    print("KERNEL_OK")
</pallas_src>

<mosaic_0001>
module attributes {stable_mosaic.version = 11 : i64} {
  func.func @_hybrid_kernel(%arg0: i32, %arg1: memref<16x16xf32, #tpu.memory_space<vmem>>, %arg2: memref<16x16xf32, #tpu.memory_space<vmem>>, %arg3: memref<96x16xf32, #tpu.memory_space<vmem>>, %arg4: memref<96x16xf32, #tpu.memory_space<vmem>>, %arg5: memref<96x16xf32, #tpu.memory_space<vmem>>, %arg6: memref<96x16xf32, #tpu.memory_space<vmem>>, %arg7: memref<96x16xf32, #tpu.memory_space<vmem>>) attributes {dimension_semantics = [#tpu.dimension_semantics<parallel>], iteration_bounds = array<i64: 1>, scalar_prefetch = 0 : i64, scratch_operands = 0 : i64, tpu.core_type = #tpu.core_type<tc>, window_params = [{pipeline_mode = #tpu.pipeline_mode<synchronous>, transform_indices = @transform_0, window_bounds = array<i64: 16, 16>}, {pipeline_mode = #tpu.pipeline_mode<synchronous>, transform_indices = @transform_1, window_bounds = array<i64: 16, 16>}, {transform_indices = @transform_2, window_bounds = array<i64: 96, 16>}, {transform_indices = @transform_3, window_bounds = array<i64: 96, 16>}, {transform_indices = @transform_4, window_bounds = array<i64: 96, 16>}, {transform_indices = @transform_5, window_bounds = array<i64: 96, 16>}, {transform_indices = @transform_6, window_bounds = array<i64: 96, 16>}]} {
    %c0 = arith.constant 0 : index
    %c0_0 = arith.constant 0 : index
    %0 = vector.load %arg1[%c0, %c0_0] : memref<16x16xf32, #tpu.memory_space<vmem>>, vector<16x16xf32>
    %c0_1 = arith.constant 0 : index
    %c0_2 = arith.constant 0 : index
    %1 = vector.load %arg2[%c0_1, %c0_2] : memref<16x16xf32, #tpu.memory_space<vmem>>, vector<16x16xf32>
    %c0_3 = arith.constant 0 : index
    %c0_4 = arith.constant 0 : index
    %2 = vector.load %arg3[%c0_3, %c0_4] : memref<96x16xf32, #tpu.memory_space<vmem>>, vector<96x16xf32>
    %c0_5 = arith.constant 0 : index
    %c0_6 = arith.constant 0 : index
    %3 = vector.load %arg4[%c0_5, %c0_6] : memref<96x16xf32, #tpu.memory_space<vmem>>, vector<96x16xf32>
    %cst = arith.constant dense<0.000000e+00> : vector<96x16xf32>
    %4 = tpu.matmul %2, %1, %cst {dimension_numbers = #tpu.dot_dimension_numbers<[1], [0], [0], [1], [0, 0, 1, 1], [], []>} : vector<96x16xf32>, vector<16x16xf32>, vector<96x16xf32> -> vector<96x16xf32>
    %cst_7 = arith.constant dense<0.000000e+00> : vector<96x16xf32>
    %5 = tpu.matmul %3, %1, %cst_7 {dimension_numbers = #tpu.dot_dimension_numbers<[1], [0], [0], [1], [0, 0, 1, 1], [], []>} : vector<96x16xf32>, vector<16x16xf32>, vector<96x16xf32> -> vector<96x16xf32>
    %6 = vector.extract_strided_slice %4 {offsets = [0, 0], sizes = [16, 16], strides = [1, 1]} : vector<96x16xf32> to vector<16x16xf32>
    %cst_8 = arith.constant dense<0.000000e+00> : vector<16x16xf32>
    %7 = tpu.matmul %0, %6, %cst_8 {dimension_numbers = #tpu.dot_dimension_numbers<[1], [0], [0], [1], [0, 0, 1, 1], [], []>} : vector<16x16xf32>, vector<16x16xf32>, vector<16x16xf32> -> vector<16x16xf32>
    %8 = vector.extract_strided_slice %5 {offsets = [0, 0], sizes = [16, 16], strides = [1, 1]} : vector<96x16xf32> to vector<16x16xf32>
    %cst_9 = arith.constant dense<0.000000e+00> : vector<16x16xf32>
    %9 = tpu.matmul %0, %8, %cst_9 {dimension_numbers = #tpu.dot_dimension_numbers<[1], [0], [0], [1], [0, 0, 1, 1], [], []>} : vector<16x16xf32>, vector<16x16xf32>, vector<16x16xf32> -> vector<16x16xf32>
    %10 = vector.extract_strided_slice %3 {offsets = [0, 0], sizes = [16, 16], strides = [1, 1]} : vector<96x16xf32> to vector<16x16xf32>
    %11 = arith.subf %10, %9 : vector<16x16xf32>
    %c0_10 = arith.constant 0 : index
    %c0_11 = arith.constant 0 : index
    %12 = vector.load %arg5[%c0_10, %c0_11] : memref<96x16xf32, #tpu.memory_space<vmem>>, vector<16x16xf32>
    tpu.vector_store %arg5[%c0_10, %c0_11], %7 {strides = array<i32>} : memref<96x16xf32, #tpu.memory_space<vmem>>, vector<16x16xf32>,
    %c0_12 = arith.constant 0 : index
    %c0_13 = arith.constant 0 : index
    %13 = vector.load %arg6[%c0_12, %c0_13] : memref<96x16xf32, #tpu.memory_space<vmem>>, vector<16x16xf32>
    tpu.vector_store %arg6[%c0_12, %c0_13], %11 {strides = array<i32>} : memref<96x16xf32, #tpu.memory_space<vmem>>, vector<16x16xf32>,
    %14 = arith.addf %7, %11 : vector<16x16xf32>
    %cst_14 = arith.constant 0.000000e+00 : f32
    %cst_15 = arith.constant 1.000000e+00 : f32
    %15 = vector.broadcast %cst_14 : f32 to vector<16x16xf32>
    %16 = arith.maximumf %15, %14 : vector<16x16xf32>
    %17 = vector.broadcast %cst_15 : f32 to vector<16x16xf32>
    %18 = arith.minimumf %17, %16 : vector<16x16xf32>
    %c0_16 = arith.constant 0 : index
    %c0_17 = arith.constant 0 : index
    %19 = vector.load %arg7[%c0_16, %c0_17] : memref<96x16xf32, #tpu.memory_space<vmem>>, vector<16x16xf32>
    tpu.vector_store %arg7[%c0_16, %c0_17], %18 {strides = array<i32>} : memref<96x16xf32, #tpu.memory_space<vmem>>, vector<16x16xf32>,
    %20 = vector.extract_strided_slice %4 {offsets = [16, 0], sizes = [16, 16], strides = [1, 1]} : vector<96x16xf32> to vector<16x16xf32>
    %cst_18 = arith.constant dense<0.000000e+00> : vector<16x16xf32>
    %21 = tpu.matmul %0, %20, %cst_18 {dimension_numbers = #tpu.dot_dimension_numbers<[1], [0], [0], [1], [0, 0, 1, 1], [], []>} : vector<16x16xf32>, vector<16x16xf32>, vector<16x16xf32> -> vector<16x16xf32>
    %22 = vector.extract_strided_slice %5 {offsets = [16, 0], sizes = [16, 16], strides = [1, 1]} : vector<96x16xf32> to vector<16x16xf32>
    %cst_19 = arith.constant dense<0.000000e+00> : vector<16x16xf32>
    %23 = tpu.matmul %0, %22, %cst_19 {dimension_numbers = #tpu.dot_dimension_numbers<[1], [0], [0], [1], [0, 0, 1, 1], [], []>} : vector<16x16xf32>, vector<16x16xf32>, vector<16x16xf32> -> vector<16x16xf32>
    %24 = vector.extract_strided_slice %3 {offsets = [16, 0], sizes = [16, 16], strides = [1, 1]} : vector<96x16xf32> to vector<16x16xf32>
    %25 = arith.subf %24, %23 : vector<16x16xf32>
    %c16 = arith.constant 16 : index
    %c0_20 = arith.constant 0 : index
    %26 = vector.load %arg5[%c16, %c0_20] : memref<96x16xf32, #tpu.memory_space<vmem>>, vector<16x16xf32>
    tpu.vector_store %arg5[%c16, %c0_20], %21 {strides = array<i32>} : memref<96x16xf32, #tpu.memory_space<vmem>>, vector<16x16xf32>,
    %c16_21 = arith.constant 16 : index
    %c0_22 = arith.constant 0 : index
    %27 = vector.load %arg6[%c16_21, %c0_22] : memref<96x16xf32, #tpu.memory_space<vmem>>, vector<16x16xf32>
    tpu.vector_store %arg6[%c16_21, %c0_22], %25 {strides = array<i32>} : memref<96x16xf32, #tpu.memory_space<vmem>>, vector<16x16xf32>,
    %28 = arith.addf %21, %25 : vector<16x16xf32>
    %cst_23 = arith.constant 0.000000e+00 : f32
    %cst_24 = arith.constant 1.000000e+00 : f32
    %29 = vector.broadcast %cst_23 : f32 to vector<16x16xf32>
    %30 = arith.maximumf %29, %28 : vector<16x16xf32>
    %31 = vector.broadcast %cst_24 : f32 to vector<16x16xf32>
    %32 = arith.minimumf %31, %30 : vector<16x16xf32>
    %c16_25 = arith.constant 16 : index
    %c0_26 = arith.constant 0 : index
    %33 = vector.load %arg7[%c16_25, %c0_26] : memref<96x16xf32, #tpu.memory_space<vmem>>, vector<16x16xf32>
    tpu.vector_store %arg7[%c16_25, %c0_26], %32 {strides = array<i32>} : memref<96x16xf32, #tpu.memory_space<vmem>>, vector<16x16xf32>,
    %34 = vector.extract_strided_slice %4 {offsets = [32, 0], sizes = [16, 16], strides = [1, 1]} : vector<96x16xf32> to vector<16x16xf32>
    %cst_27 = arith.constant dense<0.000000e+00> : vector<16x16xf32>
    %35 = tpu.matmul %0, %34, %cst_27 {dimension_numbers = #tpu.dot_dimension_numbers<[1], [0], [0], [1], [0, 0, 1, 1], [], []>} : vector<16x16xf32>, vector<16x16xf32>, vector<16x16xf32> -> vector<16x16xf32>
    %36 = vector.extract_strided_slice %5 {offsets = [32, 0], sizes = [16, 16], strides = [1, 1]} : vector<96x16xf32> to vector<16x16xf32>
    %cst_28 = arith.constant dense<0.000000e+00> : vector<16x16xf32>
    %37 = tpu.matmul %0, %36, %cst_28 {dimension_numbers = #tpu.dot_dimension_numbers<[1], [0], [0], [1], [0, 0, 1, 1], [], []>} : vector<16x16xf32>, vector<16x16xf32>, vector<16x16xf32> -> vector<16x16xf32>
    %38 = vector.extract_strided_slice %3 {offsets = [32, 0], sizes = [16, 16], strides = [1, 1]} : vector<96x16xf32> to vector<16x16xf32>
    %39 = arith.subf %38, %37 : vector<16x16xf32>
    %c32 = arith.constant 32 : index
    %c0_29 = arith.constant 0 : index
    %40 = vector.load %arg5[%c32, %c0_29] : memref<96x16xf32, #tpu.memory_space<vmem>>, vector<16x16xf32>
    tpu.vector_store %arg5[%c32, %c0_29], %35 {strides = array<i32>} : memref<96x16xf32, #tpu.memory_space<vmem>>, vector<16x16xf32>,
    %c32_30 = arith.constant 32 : index
    %c0_31 = arith.constant 0 : index
    %41 = vector.load %arg6[%c32_30, %c0_31] : memref<96x16xf32, #tpu.memory_space<vmem>>, vector<16x16xf32>
    tpu.vector_store %arg6[%c32_30, %c0_31], %39 {strides = array<i32>} : memref<96x16xf32, #tpu.memory_space<vmem>>, vector<16x16xf32>,
    %42 = arith.addf %35, %39 : vector<16x16xf32>
    %cst_32 = arith.constant 0.000000e+00 : f32
    %cst_33 = arith.constant 1.000000e+00 : f32
    %43 = vector.broadcast %cst_32 : f32 to vector<16x16xf32>
    %44 = arith.maximumf %43, %42 : vector<16x16xf32>
    %45 = vector.broadcast %cst_33 : f32 to vector<16x16xf32>
    %46 = arith.minimumf %45, %44 : vector<16x16xf32>
    %c32_34 = arith.constant 32 : index
    %c0_35 = arith.constant 0 : index
    %47 = vector.load %arg7[%c32_34, %c0_35] : memref<96x16xf32, #tpu.memory_space<vmem>>, vector<16x16xf32>
    tpu.vector_store %arg7[%c32_34, %c0_35], %46 {strides = array<i32>} : memref<96x16xf32, #tpu.memory_space<vmem>>, vector<16x16xf32>,
    %48 = vector.extract_strided_slice %4 {offsets = [48, 0], sizes = [16, 16], strides = [1, 1]} : vector<96x16xf32> to vector<16x16xf32>
    %cst_36 = arith.constant dense<0.000000e+00> : vector<16x16xf32>
    %49 = tpu.matmul %0, %48, %cst_36 {dimension_numbers = #tpu.dot_dimension_numbers<[1], [0], [0], [1], [0, 0, 1, 1], [], []>} : vector<16x16xf32>, vector<16x16xf32>, vector<16x16xf32> -> vector<16x16xf32>
    %50 = vector.extract_strided_slice %5 {offsets = [48, 0], sizes = [16, 16], strides = [1, 1]} : vector<96x16xf32> to vector<16x16xf32>
    %cst_37 = arith.constant dense<0.000000e+00> : vector<16x16xf32>
    %51 = tpu.matmul %0, %50, %cst_37 {dimension_numbers = #tpu.dot_dimension_numbers<[1], [0], [0], [1], [0, 0, 1, 1], [], []>} : vector<16x16xf32>, vector<16x16xf32>, vector<16x16xf32> -> vector<16x16xf32>
    %52 = vector.extract_strided_slice %3 {offsets = [48, 0], sizes = [16, 16], strides = [1, 1]} : vector<96x16xf32> to vector<16x16xf32>
    %53 = arith.subf %52, %51 : vector<16x16xf32>
    %c48 = arith.constant 48 : index
    %c0_38 = arith.constant 0 : index
    %54 = vector.load %arg5[%c48, %c0_38] : memref<96x16xf32, #tpu.memory_space<vmem>>, vector<16x16xf32>
    tpu.vector_store %arg5[%c48, %c0_38], %49 {strides = array<i32>} : memref<96x16xf32, #tpu.memory_space<vmem>>, vector<16x16xf32>,
    %c48_39 = arith.constant 48 : index
    %c0_40 = arith.constant 0 : index
    %55 = vector.load %arg6[%c48_39, %c0_40] : memref<96x16xf32, #tpu.memory_space<vmem>>, vector<16x16xf32>
    tpu.vector_store %arg6[%c48_39, %c0_40], %53 {strides = array<i32>} : memref<96x16xf32, #tpu.memory_space<vmem>>, vector<16x16xf32>,
    %56 = arith.addf %49, %53 : vector<16x16xf32>
    %cst_41 = arith.constant 0.000000e+00 : f32
    %cst_42 = arith.constant 1.000000e+00 : f32
    %57 = vector.broadcast %cst_41 : f32 to vector<16x16xf32>
    %58 = arith.maximumf %57, %56 : vector<16x16xf32>
    %59 = vector.broadcast %cst_42 : f32 to vector<16x16xf32>
    %60 = arith.minimumf %59, %58 : vector<16x16xf32>
    %c48_43 = arith.constant 48 : index
    %c0_44 = arith.constant 0 : index
    %61 = vector.load %arg7[%c48_43, %c0_44] : memref<96x16xf32, #tpu.memory_space<vmem>>, vector<16x16xf32>
    tpu.vector_store %arg7[%c48_43, %c0_44], %60 {strides = array<i32>} : memref<96x16xf32, #tpu.memory_space<vmem>>, vector<16x16xf32>,
    %62 = vector.extract_strided_slice %4 {offsets = [64, 0], sizes = [16, 16], strides = [1, 1]} : vector<96x16xf32> to vector<16x16xf32>
    %cst_45 = arith.constant dense<0.000000e+00> : vector<16x16xf32>
    %63 = tpu.matmul %0, %62, %cst_45 {dimension_numbers = #tpu.dot_dimension_numbers<[1], [0], [0], [1], [0, 0, 1, 1], [], []>} : vector<16x16xf32>, vector<16x16xf32>, vector<16x16xf32> -> vector<16x16xf32>
    %64 = vector.extract_strided_slice %5 {offsets = [64, 0], sizes = [16, 16], strides = [1, 1]} : vector<96x16xf32> to vector<16x16xf32>
    %cst_46 = arith.constant dense<0.000000e+00> : vector<16x16xf32>
    %65 = tpu.matmul %0, %64, %cst_46 {dimension_numbers = #tpu.dot_dimension_numbers<[1], [0], [0], [1], [0, 0, 1, 1], [], []>} : vector<16x16xf32>, vector<16x16xf32>, vector<16x16xf32> -> vector<16x16xf32>
    %66 = vector.extract_strided_slice %3 {offsets = [64, 0], sizes = [16, 16], strides = [1, 1]} : vector<96x16xf32> to vector<16x16xf32>
    %67 = arith.subf %66, %65 : vector<16x16xf32>
    %c64 = arith.constant 64 : index
    %c0_47 = arith.constant 0 : index
    %68 = vector.load %arg5[%c64, %c0_47] : memref<96x16xf32, #tpu.memory_space<vmem>>, vector<16x16xf32>
    tpu.vector_store %arg5[%c64, %c0_47], %63 {strides = array<i32>} : memref<96x16xf32, #tpu.memory_space<vmem>>, vector<16x16xf32>,
    %c64_48 = arith.constant 64 : index
    %c0_49 = arith.constant 0 : index
    %69 = vector.load %arg6[%c64_48, %c0_49] : memref<96x16xf32, #tpu.memory_space<vmem>>, vector<16x16xf32>
    tpu.vector_store %arg6[%c64_48, %c0_49], %67 {strides = array<i32>} : memref<96x16xf32, #tpu.memory_space<vmem>>, vector<16x16xf32>,
    %70 = arith.addf %63, %67 : vector<16x16xf32>
    %cst_50 = arith.constant 0.000000e+00 : f32
    %cst_51 = arith.constant 1.000000e+00 : f32
    %71 = vector.broadcast %cst_50 : f32 to vector<16x16xf32>
    %72 = arith.maximumf %71, %70 : vector<16x16xf32>
    %73 = vector.broadcast %cst_51 : f32 to vector<16x16xf32>
    %74 = arith.minimumf %73, %72 : vector<16x16xf32>
    %c64_52 = arith.constant 64 : index
    %c0_53 = arith.constant 0 : index
    %75 = vector.load %arg7[%c64_52, %c0_53] : memref<96x16xf32, #tpu.memory_space<vmem>>, vector<16x16xf32>
    tpu.vector_store %arg7[%c64_52, %c0_53], %74 {strides = array<i32>} : memref<96x16xf32, #tpu.memory_space<vmem>>, vector<16x16xf32>,
    %76 = vector.extract_strided_slice %4 {offsets = [80, 0], sizes = [16, 16], strides = [1, 1]} : vector<96x16xf32> to vector<16x16xf32>
    %cst_54 = arith.constant dense<0.000000e+00> : vector<16x16xf32>
    %77 = tpu.matmul %0, %76, %cst_54 {dimension_numbers = #tpu.dot_dimension_numbers<[1], [0], [0], [1], [0, 0, 1, 1], [], []>} : vector<16x16xf32>, vector<16x16xf32>, vector<16x16xf32> -> vector<16x16xf32>
    %78 = vector.extract_strided_slice %5 {offsets = [80, 0], sizes = [16, 16], strides = [1, 1]} : vector<96x16xf32> to vector<16x16xf32>
    %cst_55 = arith.constant dense<0.000000e+00> : vector<16x16xf32>
    %79 = tpu.matmul %0, %78, %cst_55 {dimension_numbers = #tpu.dot_dimension_numbers<[1], [0], [0], [1], [0, 0, 1, 1], [], []>} : vector<16x16xf32>, vector<16x16xf32>, vector<16x16xf32> -> vector<16x16xf32>
    %80 = vector.extract_strided_slice %3 {offsets = [80, 0], sizes = [16, 16], strides = [1, 1]} : vector<96x16xf32> to vector<16x16xf32>
    %81 = arith.subf %80, %79 : vector<16x16xf32>
    %c80 = arith.constant 80 : index
    %c0_56 = arith.constant 0 : index
    %82 = vector.load %arg5[%c80, %c0_56] : memref<96x16xf32, #tpu.memory_space<vmem>>, vector<16x16xf32>
    tpu.vector_store %arg5[%c80, %c0_56], %77 {strides = array<i32>} : memref<96x16xf32, #tpu.memory_space<vmem>>, vector<16x16xf32>,
    %c80_57 = arith.constant 80 : index
    %c0_58 = arith.constant 0 : index
    %83 = vector.load %arg6[%c80_57, %c0_58] : memref<96x16xf32, #tpu.memory_space<vmem>>, vector<16x16xf32>
    tpu.vector_store %arg6[%c80_57, %c0_58], %81 {strides = array<i32>} : memref<96x16xf32, #tpu.memory_space<vmem>>, vector<16x16xf32>,
    %84 = arith.addf %77, %81 : vector<16x16xf32>
    %cst_59 = arith.constant 0.000000e+00 : f32
    %cst_60 = arith.constant 1.000000e+00 : f32
    %85 = vector.broadcast %cst_59 : f32 to vector<16x16xf32>
    %86 = arith.maximumf %85, %84 : vector<16x16xf32>
    %87 = vector.broadcast %cst_60 : f32 to vector<16x16xf32>
    %88 = arith.minimumf %87, %86 : vector<16x16xf32>
    %c80_61 = arith.constant 80 : index
    %c0_62 = arith.constant 0 : index
    %89 = vector.load %arg7[%c80_61, %c0_62] : memref<96x16xf32, #tpu.memory_space<vmem>>, vector<16x16xf32>
    tpu.vector_store %arg7[%c80_61, %c0_62], %88 {strides = array<i32>} : memref<96x16xf32, #tpu.memory_space<vmem>>, vector<16x16xf32>,
    return
  }
  func.func @transform_0(%arg0: i32) -> (i32, i32) {
    %c0_i32 = arith.constant 0 : i32
    %c0_i32_0 = arith.constant 0 : i32
    %c0_i32_1 = arith.constant 0 : i32
    return %c0_i32, %c0_i32_0 : i32, i32
  }
  func.func @transform_1(%arg0: i32) -> (i32, i32) {
    %c0_i32 = arith.constant 0 : i32
    %c0_i32_0 = arith.constant 0 : i32
    %c0_i32_1 = arith.constant 0 : i32
    return %c0_i32, %c0_i32_0 : i32, i32
  }
  func.func @transform_2(%arg0: i32) -> (i32, i32) {
    %c0_i32 = arith.constant 0 : i32
    %c0_i32_0 = arith.constant 0 : i32
    return %arg0, %c0_i32 : i32, i32
  }
  func.func @transform_3(%arg0: i32) -> (i32, i32) {
    %c0_i32 = arith.constant 0 : i32
    %c0_i32_0 = arith.constant 0 : i32
    return %arg0, %c0_i32 : i32, i32
  }
  func.func @transform_4(%arg0: i32) -> (i32, i32) {
    %c0_i32 = arith.constant 0 : i32
    %c0_i32_0 = arith.constant 0 : i32
    return %arg0, %c0_i32 : i32, i32
  }
  func.func @transform_5(%arg0: i32) -> (i32, i32) {
    %c0_i32 = arith.constant 0 : i32
    %c0_i32_0 = arith.constant 0 : i32
    return %arg0, %c0_i32 : i32, i32
  }
  func.func @transform_6(%arg0: i32) -> (i32, i32) {
    %c0_i32 = arith.constant 0 : i32
    %c0_i32_0 = arith.constant 0 : i32
    return %arg0, %c0_i32 : i32, i32
  }
}

</mosaic_0001>

<llo_original>
// kernel: tpu_custom_call.1
$region0: #{tpu_custom_call.1}
  #allocation0 [shape = 'u32[]', space=smem, size = 0x4, offset = 0x4, fixed_abs, tag = 'smem constant byte address 0x4 - core index']
  #allocation1 [shape = 'u32[144,128]{1,0:T(1,128)}', space=vmem, size = 0x12000, scoped, tag = 'internal scratch']
  %s0 = inlined_call_operand.vmem [shape: f32[16,16], index: 0, kind: input, shape index: {}]
  %s1 = inlined_call_operand.vmem [shape: f32[16,16], index: 1, kind: input, shape index: {}]
  %s2 = inlined_call_operand.vmem [shape: f32[96,16], index: 2, kind: input, shape index: {}]
  %s3 = inlined_call_operand.vmem [shape: f32[96,16], index: 3, kind: input, shape index: {}]
  %s4 = inlined_call_operand.vmem [shape: f32[96,16], index: 4, kind: output, shape index: {0}]
  %s5 = inlined_call_operand.vmem [shape: f32[96,16], index: 5, kind: output, shape index: {1}]
  %s6 = inlined_call_operand.vmem [shape: f32[96,16], index: 6, kind: output, shape index: {2}]
  %7 = xla_tuple %s4, %s5, %s6
  %s8 = sld [smem:[#allocation0]]
  $region42: #{tpu_custom_call.1} parent=0
    _
  %s10 = ssub.s32 1, %s8
  %s11 = scalar_select 0, %s10, %s8
  // Predicated region
  $region2: #{tpu_custom_call.1} parent=0 // pred_check
    _
  $region3: #{tpu_custom_call.1} parent=0 // pred_check_branch
    %13 = sbr.rel (0) target = $region5
  $region4: #{tpu_custom_call.1} parent=0 // pred_region
    _
  $region5: #{tpu_custom_call.1} parent=0 // pred_fallthru
    _
  // Predicated region
  $region6: #{tpu_custom_call.1} parent=0 // pred_check
    _
  $region7: #{tpu_custom_call.1} parent=0 // pred_check_branch
    %15 = sbr.rel (0) target = $region9
  $region8: #{tpu_custom_call.1} parent=0 // pred_region
    _
  $region9: #{tpu_custom_call.1} parent=0 // pred_fallthru
    _
  // Predicated region
  $region10: #{tpu_custom_call.1} parent=0 // pred_check
    _
  $region11: #{tpu_custom_call.1} parent=0 // pred_check_branch
    %17 = sbr.rel (0) target = $region13
  $region12: #{tpu_custom_call.1} parent=0 // pred_region
    _
  $region13: #{tpu_custom_call.1} parent=0 // pred_fallthru
    _
  // Predicated region
  $region14: #{tpu_custom_call.1} parent=0 // pred_check
    _
  $region15: #{tpu_custom_call.1} parent=0 // pred_check_branch
    %19 = sbr.rel (0) target = $region17
  $region16: #{tpu_custom_call.1} parent=0 // pred_region
    _
  $region17: #{tpu_custom_call.1} parent=0 // pred_fallthru
    _
  %v20 = vld [vmem:[%s0] sm:$0xff]
  %v21 = vld [vmem:[%s0 + $0x8] sm:$0xff]
  %v22 = vld [vmem:[%s1] sm:$0xff]
  %v23 = vld [vmem:[%s1 + $0x8] sm:$0xff]
  %v24 = vld [vmem:[%s2] sm:$0xff]
  %v25 = vld [vmem:[%s2 + $0x8] sm:$0xff]
  %v26 = vld [vmem:[%s2 + $0x10] sm:$0xff]
  %v27 = vld [vmem:[%s2 + $0x18] sm:$0xff]
  %v28 = vld [vmem:[%s2 + $0x20] sm:$0xff]
  %v29 = vld [vmem:[%s2 + $0x28] sm:$0xff]
  %v30 = vld [vmem:[%s2 + $0x30] sm:$0xff]
  %v31 = vld [vmem:[%s2 + $0x38] sm:$0xff]
  %v32 = vld [vmem:[%s2 + $0x40] sm:$0xff]
  %v33 = vld [vmem:[%s2 + $0x48] sm:$0xff]
  %v34 = vld [vmem:[%s2 + $0x50] sm:$0xff]
  %v35 = vld [vmem:[%s2 + $0x58] sm:$0xff]
  %v36 = vld [vmem:[%s3] sm:$0xff]
  %v37 = vld [vmem:[%s3 + $0x8] sm:$0xff]
  %v38 = vld [vmem:[%s3 + $0x10] sm:$0xff]
  %v39 = vld [vmem:[%s3 + $0x18] sm:$0xff]
  %v40 = vld [vmem:[%s3 + $0x20] sm:$0xff]
  %v41 = vld [vmem:[%s3 + $0x28] sm:$0xff]
  %v42 = vld [vmem:[%s3 + $0x30] sm:$0xff]
  %v43 = vld [vmem:[%s3 + $0x38] sm:$0xff]
  %v44 = vld [vmem:[%s3 + $0x40] sm:$0xff]
  %v45 = vld [vmem:[%s3 + $0x48] sm:$0xff]
  %v46 = vld [vmem:[%s3 + $0x50] sm:$0xff]
  %v47 = vld [vmem:[%s3 + $0x58] sm:$0xff]
  %vm48 = vcmask 130048
  %v50 = vsel %vm48, %v24, 0
  %v53 = vsel %vm48, %v25, 0
  %v56 = vsel %vm48, %v26, 0
  %v59 = vsel %vm48, %v27, 0
  %v62 = vsel %vm48, %v28, 0
  %v65 = vsel %vm48, %v29, 0
  %v68 = vsel %vm48, %v30, 0
  %v71 = vsel %vm48, %v31, 0
  %v74 = vsel %vm48, %v32, 0
  %v77 = vsel %vm48, %v33, 0
  %v80 = vsel %vm48, %v34, 0
  %v83 = vsel %vm48, %v35, 0
  %85 = vmatprep.subr.mxu0 0.0
  %86 = vmatpush1.msra.mxu0 %v22
  %87 = vmatprep.subr.mxu0 0.0
  %88 = vmatpush1.msra.mxu0 %v23
  %89 = vmatprep.subr.mxu0 0.0
  %90 = vmatpush1.msra.mxu0 0.0
  %91 = vmatprep.subr.mxu0 0.0
  %92 = vmatpush1.msra.mxu0 0.0
  %93 = vmatprep.subr.mxu0 0.0
  %94 = vmatpush1.msra.mxu0 0.0
  %95 = vmatprep.subr.mxu0 0.0
  %96 = vmatpush1.msra.mxu0 0.0
  %97 = vmatprep.subr.mxu0 0.0
  %98 = vmatpush1.msra.mxu0 0.0
  %99 = vmatprep.subr.mxu0 0.0
  %100 = vmatpush1.msra.mxu0 0.0
  %101 = vmatprep.subr.mxu0 0.0
  %102 = vmatpush1.msra.mxu0 0.0
  %103 = vmatprep.subr.mxu0 0.0
  %104 = vmatpush1.msra.mxu0 0.0
  %105 = vmatprep.subr.mxu0 0.0
  %106 = vmatpush1.msra.mxu0 0.0
  %107 = vmatprep.subr.mxu0 0.0
  %108 = vmatpush1.msra.mxu0 0.0
  %109 = vmatprep.subr.mxu0 0.0
  %110 = vmatpush1.msra.mxu0 0.0
  %111 = vmatprep.subr.mxu0 0.0
  %112 = vmatpush1.msra.mxu0 0.0
  %113 = vmatprep.subr.mxu0 0.0
  %114 = vmatpush1.msra.mxu0 0.0
  %115 = vmatprep.subr.mxu0 0.0
  %116 = vmatpush1.msra.mxu0 0.0
  %117 = vmatprep.subr.mxu0 0.0
  %118 = vmatpush1.msra.mxu0 0.0
  %119 = vmatprep.subr.mxu0 0.0
  %120 = vmatpush1.msra.mxu0 0.0
  %121 = vmatprep.subr.mxu0 0.0
  %122 = vmatpush1.msra.mxu0 0.0
  %123 = vmatprep.subr.mxu0 0.0
  %124 = vmatpush1.msra.mxu0 0.0
  %125 = vmatprep.subr.mxu0 0.0
  %126 = vmatpush1.msra.mxu0 0.0
  %127 = vmatprep.subr.mxu0 0.0
  %128 = vmatpush1.msra.mxu0 0.0
  %129 = vmatprep.subr.mxu0 0.0
  %130 = vmatpush1.msra.mxu0 0.0
  %131 = vmatprep.subr.mxu0 0.0
  %132 = vmatpush1.msra.mxu0 0.0
  %133 = vmatprep.subr.mxu0 0.0
  %134 = vmatpush1.msra.mxu0 0.0
  %135 = vmatprep.subr.mxu0 0.0
  %136 = vmatpush1.msra.mxu0 0.0
  %137 = vmatprep.subr.mxu0 0.0
  %138 = vmatpush1.msra.mxu0 0.0
  %139 = vmatprep.subr.mxu0 0.0
  %140 = vmatpush1.msra.mxu0 0.0
  %141 = vmatprep.subr.mxu0 0.0
  %142 = vmatpush1.msra.mxu0 0.0
  %143 = vmatprep.subr.mxu0 0.0
  %144 = vmatpush1.msra.mxu0 0.0
  %145 = vmatprep.subr.mxu0 0.0
  %146 = vmatpush1.msra.mxu0 0.0
  %147 = vmatprep.subr.mxu0 0.0
  %148 = vmatpush1.msra.mxu0 0.0
  %149 = vmatprep.mubr.f32.mxu0 0.0
  %150 = vmatmul.mubr.f32.gmra.mrb[0].mxu0 %v50
  %v151 = vpop.f32.mrb[0].mxu0
  %v152 = vadd.f32 0.0, %v151
  %v153 = vpop.f32.mrb[0].mxu0
  %154 = vmatprep.mubr.f32.mxu0 0.0
  %155 = vmatmul.mubr.f32.gmra.mrb[0].mxu0 %v53
  %v156 = vpop.f32.mrb[0].mxu0
  %v157 = vadd.f32 0.0, %v156
  %v158 = vpop.f32.mrb[0].mxu0
  %159 = vmatprep.mubr.f32.mxu0 0.0
  %160 = vmatmul.mubr.f32.gmra.mrb[0].mxu0 %v56
  %v161 = vpop.f32.mrb[0].mxu0
  %v162 = vadd.f32 0.0, %v161
  %v163 = vpop.f32.mrb[0].mxu0
  %164 = vmatprep.mubr.f32.mxu0 0.0
  %165 = vmatmul.mubr.f32.gmra.mrb[0].mxu0 %v59
  %v166 = vpop.f32.mrb[0].mxu0
  %v167 = vadd.f32 0.0, %v166
  %v168 = vpop.f32.mrb[0].mxu0
  %169 = vmatprep.mubr.f32.mxu0 0.0
  %170 = vmatmul.mubr.f32.gmra.mrb[0].mxu0 %v62
  %v171 = vpop.f32.mrb[0].mxu0
  %v172 = vadd.f32 0.0, %v171
  %v173 = vpop.f32.mrb[0].mxu0
  %174 = vmatprep.mubr.f32.mxu0 0.0
  %175 = vmatmul.mubr.f32.gmra.mrb[0].mxu0 %v65
  %v176 = vpop.f32.mrb[0].mxu0
  %v177 = vadd.f32 0.0, %v176
  %v178 = vpop.f32.mrb[0].mxu0
  %179 = vmatprep.mubr.f32.mxu0 0.0
  %180 = vmatmul.mubr.f32.gmra.mrb[0].mxu0 %v68
  %v181 = vpop.f32.mrb[0].mxu0
  %v182 = vadd.f32 0.0, %v181
  %v183 = vpop.f32.mrb[0].mxu0
  %184 = vmatprep.mubr.f32.mxu0 0.0
  %185 = vmatmul.mubr.f32.gmra.mrb[0].mxu0 %v71
  %v186 = vpop.f32.mrb[0].mxu0
  %v187 = vadd.f32 0.0, %v186
  %v188 = vpop.f32.mrb[0].mxu0
  %189 = vmatprep.mubr.f32.mxu0 0.0
  %190 = vmatmul.mubr.f32.gmra.mrb[0].mxu0 %v74
  %v191 = vpop.f32.mrb[0].mxu0
  %v192 = vadd.f32 0.0, %v191
  %v193 = vpop.f32.mrb[0].mxu0
  %194 = vmatprep.mubr.f32.mxu0 0.0
  %195 = vmatmul.mubr.f32.gmra.mrb[0].mxu0 %v77
  %v196 = vpop.f32.mrb[0].mxu0
  %v197 = vadd.f32 0.0, %v196
  %v198 = vpop.f32.mrb[0].mxu0
  %199 = vmatprep.mubr.f32.mxu0 0.0
  %200 = vmatmul.mubr.f32.gmra.mrb[0].mxu0 %v80
  %v201 = vpop.f32.mrb[0].mxu0
  %v202 = vadd.f32 0.0, %v201
  %v203 = vpop.f32.mrb[0].mxu0
  %204 = vmatprep.mubr.f32.mxu0 0.0
  %205 = vmatmul.mubr.f32.gmra.mrb[0].mxu0 %v83
  %v206 = vpop.f32.mrb[0].mxu0
  %v207 = vadd.f32 0.0, %v206
  %v208 = vpop.f32.mrb[0].mxu0
  %209 = vdwg.mxu0
  %v211 = vsel %vm48, %v36, 0
  %v214 = vsel %vm48, %v37, 0
  %v217 = vsel %vm48, %v38, 0
  %v220 = vsel %vm48, %v39, 0
  %v223 = vsel %vm48, %v40, 0
  %v226 = vsel %vm48, %v41, 0
  %v229 = vsel %vm48, %v42, 0
  %v232 = vsel %vm48, %v43, 0
  %v235 = vsel %vm48, %v44, 0
  %v238 = vsel %vm48, %v45, 0
  %v241 = vsel %vm48, %v46, 0
  %v244 = vsel %vm48, %v47, 0
  %246 = vmatprep.subr.mxu0 0.0
  %247 = vmatpush1.msra.mxu0 %v22
  %248 = vmatprep.subr.mxu0 0.0
  %249 = vmatpush1.msra.mxu0 %v23
  %250 = vmatprep.subr.mxu0 0.0
  %251 = vmatpush1.msra.mxu0 0.0
  %252 = vmatprep.subr.mxu0 0.0
  %253 = vmatpush1.msra.mxu0 0.0
  %254 = vmatprep.subr.mxu0 0.0
  %255 = vmatpush1.msra.mxu0 0.0
  %256 = vmatprep.subr.mxu0 0.0
  %257 = vmatpush1.msra.mxu0 0.0
  %258 = vmatprep.subr.mxu0 0.0
  %259 = vmatpush1.msra.mxu0 0.0
  %260 = vmatprep.subr.mxu0 0.0
  %261 = vmatpush1.msra.mxu0 0.0
  %262 = vmatprep.subr.mxu0 0.0
  %263 = vmatpush1.msra.mxu0 0.0
  %264 = vmatprep.subr.mxu0 0.0
  %265 = vmatpush1.msra.mxu0 0.0
  %266 = vmatprep.subr.mxu0 0.0
  %267 = vmatpush1.msra.mxu0 0.0
  %268 = vmatprep.subr.mxu0 0.0
  %269 = vmatpush1.msra.mxu0 0.0
  %270 = vmatprep.subr.mxu0 0.0
  %271 = vmatpush1.msra.mxu0 0.0
  %272 = vmatprep.subr.mxu0 0.0
  %273 = vmatpush1.msra.mxu0 0.0
  %274 = vmatprep.subr.mxu0 0.0
  %275 = vmatpush1.msra.mxu0 0.0
  %276 = vmatprep.subr.mxu0 0.0
  %277 = vmatpush1.msra.mxu0 0.0
  %278 = vmatprep.subr.mxu0 0.0
  %279 = vmatpush1.msra.mxu0 0.0
  %280 = vmatprep.subr.mxu0 0.0
  %281 = vmatpush1.msra.mxu0 0.0
  %282 = vmatprep.subr.mxu0 0.0
  %283 = vmatpush1.msra.mxu0 0.0
  %284 = vmatprep.subr.mxu0 0.0
  %285 = vmatpush1.msra.mxu0 0.0
  %286 = vmatprep.subr.mxu0 0.0
  %287 = vmatpush1.msra.mxu0 0.0
  %288 = vmatprep.subr.mxu0 0.0
  %289 = vmatpush1.msra.mxu0 0.0
  %290 = vmatprep.subr.mxu0 0.0
  %291 = vmatpush1.msra.mxu0 0.0
  %292 = vmatprep.subr.mxu0 0.0
  %293 = vmatpush1.msra.mxu0 0.0
  %294 = vmatprep.subr.mxu0 0.0
  %295 = vmatpush1.msra.mxu0 0.0
  %296 = vmatprep.subr.mxu0 0.0
  %297 = vmatpush1.msra.mxu0 0.0
  %298 = vmatprep.subr.mxu0 0.0
  %299 = vmatpush1.msra.mxu0 0.0
  %300 = vmatprep.subr.mxu0 0.0
  %301 = vmatpush1.msra.mxu0 0.0
  %302 = vmatprep.subr.mxu0 0.0
  %303 = vmatpush1.msra.mxu0 0.0
  %304 = vmatprep.subr.mxu0 0.0
  %305 = vmatpush1.msra.mxu0 0.0
  %306 = vmatprep.subr.mxu0 0.0
  %307 = vmatpush1.msra.mxu0 0.0
  %308 = vmatprep.subr.mxu0 0.0
  %309 = vmatpush1.msra.mxu0 0.0
  %310 = vmatprep.mubr.f32.mxu0 0.0
  %311 = vmatmul.mubr.f32.gmra.mrb[0].mxu0 %v211
  %v312 = vpop.f32.mrb[0].mxu0
  %v313 = vadd.f32 0.0, %v312
  %v314 = vpop.f32.mrb[0].mxu0
  %315 = vmatprep.mubr.f32.mxu0 0.0
  %316 = vmatmul.mubr.f32.gmra.mrb[0].mxu0 %v214
  %v317 = vpop.f32.mrb[0].mxu0
  %v318 = vadd.f32 0.0, %v317
  %v319 = vpop.f32.mrb[0].mxu0
  %320 = vmatprep.mubr.f32.mxu0 0.0
  %321 = vmatmul.mubr.f32.gmra.mrb[0].mxu0 %v217
  %v322 = vpop.f32.mrb[0].mxu0
  %v323 = vadd.f32 0.0, %v322
  %v324 = vpop.f32.mrb[0].mxu0
  %325 = vmatprep.mubr.f32.mxu0 0.0
  %326 = vmatmul.mubr.f32.gmra.mrb[0].mxu0 %v220
  %v327 = vpop.f32.mrb[0].mxu0
  %v328 = vadd.f32 0.0, %v327
  %v329 = vpop.f32.mrb[0].mxu0
  %330 = vmatprep.mubr.f32.mxu0 0.0
  %331 = vmatmul.mubr.f32.gmra.mrb[0].mxu0 %v223
  %v332 = vpop.f32.mrb[0].mxu0
  %v333 = vadd.f32 0.0, %v332
  %v334 = vpop.f32.mrb[0].mxu0
  %335 = vmatprep.mubr.f32.mxu0 0.0
  %336 = vmatmul.mubr.f32.gmra.mrb[0].mxu0 %v226
  %v337 = vpop.f32.mrb[0].mxu0
  %v338 = vadd.f32 0.0, %v337
  %v339 = vpop.f32.mrb[0].mxu0
  %340 = vmatprep.mubr.f32.mxu0 0.0
  %341 = vmatmul.mubr.f32.gmra.mrb[0].mxu0 %v229
  %v342 = vpop.f32.mrb[0].mxu0
  %v343 = vadd.f32 0.0, %v342
  %v344 = vpop.f32.mrb[0].mxu0
  %345 = vmatprep.mubr.f32.mxu0 0.0
  %346 = vmatmul.mubr.f32.gmra.mrb[0].mxu0 %v232
  %v347 = vpop.f32.mrb[0].mxu0
  %v348 = vadd.f32 0.0, %v347
  %v349 = vpop.f32.mrb[0].mxu0
  %350 = vmatprep.mubr.f32.mxu0 0.0
  %351 = vmatmul.mubr.f32.gmra.mrb[0].mxu0 %v235
  %v352 = vpop.f32.mrb[0].mxu0
  %v353 = vadd.f32 0.0, %v352
  %v354 = vpop.f32.mrb[0].mxu0
  %355 = vmatprep.mubr.f32.mxu0 0.0
  %356 = vmatmul.mubr.f32.gmra.mrb[0].mxu0 %v238
  %v357 = vpop.f32.mrb[0].mxu0
  %v358 = vadd.f32 0.0, %v357
  %v359 = vpop.f32.mrb[0].mxu0
  %360 = vmatprep.mubr.f32.mxu0 0.0
  %361 = vmatmul.mubr.f32.gmra.mrb[0].mxu0 %v241
  %v362 = vpop.f32.mrb[0].mxu0
  %v363 = vadd.f32 0.0, %v362
  %v364 = vpop.f32.mrb[0].mxu0
  %365 = vmatprep.mubr.f32.mxu0 0.0
  %366 = vmatmul.mubr.f32.gmra.mrb[0].mxu0 %v244
  %v367 = vpop.f32.mrb[0].mxu0
  %v368 = vadd.f32 0.0, %v367
  %v369 = vpop.f32.mrb[0].mxu0
  %370 = vdwg.mxu0
  %v372 = vsel %vm48, %v20, 0
  %v375 = vsel %vm48, %v21, 0
  %377 = vmatprep.subr.mxu0 0.0
  %378 = vmatpush1.msra.mxu0 %v152
  %379 = vmatprep.subr.mxu0 0.0
  %380 = vmatpush1.msra.mxu0 %v157
  %381 = vmatprep.subr.mxu0 0.0
  %382 = vmatpush1.msra.mxu0 0.0
  %383 = vmatprep.subr.mxu0 0.0
  %384 = vmatpush1.msra.mxu0 0.0
  %385 = vmatprep.subr.mxu0 0.0
  %386 = vmatpush1.msra.mxu0 0.0
  %387 = vmatprep.subr.mxu0 0.0
  %388 = vmatpush1.msra.mxu0 0.0
  %389 = vmatprep.subr.mxu0 0.0
  %390 = vmatpush1.msra.mxu0 0.0
  %391 = vmatprep.subr.mxu0 0.0
  %392 = vmatpush1.msra.mxu0 0.0
  %393 = vmatprep.subr.mxu0 0.0
  %394 = vmatpush1.msra.mxu0 0.0
  %395 = vmatprep.subr.mxu0 0.0
  %396 = vmatpush1.msra.mxu0 0.0
  %397 = vmatprep.subr.mxu0 0.0
  %398 = vmatpush1.msra.mxu0 0.0
  %399 = vmatprep.subr.mxu0 0.0
  %400 = vmatpush1.msra.mxu0 0.0
  %401 = vmatprep.subr.mxu0 0.0
  %402 = vmatpush1.msra.mxu0 0.0
  %403 = vmatprep.subr.mxu0 0.0
  %404 = vmatpush1.msra.mxu0 0.0
  %405 = vmatprep.subr.mxu0 0.0
  %406 = vmatpush1.msra.mxu0 0.0
  %407 = vmatprep.subr.mxu0 0.0
  %408 = vmatpush1.msra.mxu0 0.0
  %409 = vmatprep.subr.mxu0 0.0
  %410 = vmatpush1.msra.mxu0 0.0
  %411 = vmatprep.subr.mxu0 0.0
  %412 = vmatpush1.msra.mxu0 0.0
  %413 = vmatprep.subr.mxu0 0.0
  %414 = vmatpush1.msra.mxu0 0.0
  %415 = vmatprep.subr.mxu0 0.0
  %416 = vmatpush1.msra.mxu0 0.0
  %417 = vmatprep.subr.mxu0 0.0
  %418 = vmatpush1.msra.mxu0 0.0
  %419 = vmatprep.subr.mxu0 0.0
  %420 = vmatpush1.msra.mxu0 0.0
  %421 = vmatprep.subr.mxu0 0.0
  %422 = vmatpush1.msra.mxu0 0.0
  %423 = vmatprep.subr.mxu0 0.0
  %424 = vmatpush1.msra.mxu0 0.0
  %425 = vmatprep.subr.mxu0 0.0
  %426 = vmatpush1.msra.mxu0 0.0
  %427 = vmatprep.subr.mxu0 0.0
  %428 = vmatpush1.msra.mxu0 0.0
  %429 = vmatprep.subr.mxu0 0.0
  %430 = vmatpush1.msra.mxu0 0.0
  %431 = vmatprep.subr.mxu0 0.0
  %432 = vmatpush1.msra.mxu0 0.0
  %433 = vmatprep.subr.mxu0 0.0
  %434 = vmatpush1.msra.mxu0 0.0
  %435 = vmatprep.subr.mxu0 0.0
  %436 = vmatpush1.msra.mxu0 0.0
  %437 = vmatprep.subr.mxu0 0.0
  %438 = vmatpush1.msra.mxu0 0.0
  %439 = vmatprep.subr.mxu0 0.0
  %440 = vmatpush1.msra.mxu0 0.0
  %441 = vmatprep.mubr.f32.mxu0 0.0
  %442 = vmatmul.mubr.f32.gmra.mrb[0].mxu0 %v372
  %v443 = vpop.f32.mrb[0].mxu0
  %v444 = vadd.f32 0.0, %v443
  %v445 = vpop.f32.mrb[0].mxu0
  %446 = vmatprep.mubr.f32.mxu0 0.0
  %447 = vmatmul.mubr.f32.gmra.mrb[0].mxu0 %v375
  %v448 = vpop.f32.mrb[0].mxu0
  %v449 = vadd.f32 0.0, %v448
  %v450 = vpop.f32.mrb[0].mxu0
  %451 = vdwg.mxu0
  %452 = vmatprep.subr.mxu0 0.0
  %453 = vmatpush1.msra.mxu0 %v313
  %454 = vmatprep.subr.mxu0 0.0
  %455 = vmatpush1.msra.mxu0 %v318
  %456 = vmatprep.subr.mxu0 0.0
  %457 = vmatpush1.msra.mxu0 0.0
  %458 = vmatprep.subr.mxu0 0.0
  %459 = vmatpush1.msra.mxu0 0.0
  %460 = vmatprep.subr.mxu0 0.0
  %461 = vmatpush1.msra.mxu0 0.0
  %462 = vmatprep.subr.mxu0 0.0
  %463 = vmatpush1.msra.mxu0 0.0
  %464 = vmatprep.subr.mxu0 0.0
  %465 = vmatpush1.msra.mxu0 0.0
  %466 = vmatprep.subr.mxu0 0.0
  %467 = vmatpush1.msra.mxu0 0.0
  %468 = vmatprep.subr.mxu0 0.0
  %469 = vmatpush1.msra.mxu0 0.0
  %470 = vmatprep.subr.mxu0 0.0
  %471 = vmatpush1.msra.mxu0 0.0
  %472 = vmatprep.subr.mxu0 0.0
  %473 = vmatpush1.msra.mxu0 0.0
  %474 = vmatprep.subr.mxu0 0.0
  %475 = vmatpush1.msra.mxu0 0.0
  %476 = vmatprep.subr.mxu0 0.0
  %477 = vmatpush1.msra.mxu0 0.0
  %478 = vmatprep.subr.mxu0 0.0
  %479 = vmatpush1.msra.mxu0 0.0
  %480 = vmatprep.subr.mxu0 0.0
  %481 = vmatpush1.msra.mxu0 0.0
  %482 = vmatprep.subr.mxu0 0.0
  %483 = vmatpush1.msra.mxu0 0.0
  %484 = vmatprep.subr.mxu0 0.0
  %485 = vmatpush1.msra.mxu0 0.0
  %486 = vmatprep.subr.mxu0 0.0
  %487 = vmatpush1.msra.mxu0 0.0
  %488 = vmatprep.subr.mxu0 0.0
  %489 = vmatpush1.msra.mxu0 0.0
  %490 = vmatprep.subr.mxu0 0.0
  %491 = vmatpush1.msra.mxu0 0.0
  %492 = vmatprep.subr.mxu0 0.0
  %493 = vmatpush1.msra.mxu0 0.0
  %494 = vmatprep.subr.mxu0 0.0
  %495 = vmatpush1.msra.mxu0 0.0
  %496 = vmatprep.subr.mxu0 0.0
  %497 = vmatpush1.msra.mxu0 0.0
  %498 = vmatprep.subr.mxu0 0.0
  %499 = vmatpush1.msra.mxu0 0.0
  %500 = vmatprep.subr.mxu0 0.0
  %501 = vmatpush1.msra.mxu0 0.0
  %502 = vmatprep.subr.mxu0 0.0
  %503 = vmatpush1.msra.mxu0 0.0
  %504 = vmatprep.subr.mxu0 0.0
  %505 = vmatpush1.msra.mxu0 0.0
  %506 = vmatprep.subr.mxu0 0.0
  %507 = vmatpush1.msra.mxu0 0.0
  %508 = vmatprep.subr.mxu0 0.0
  %509 = vmatpush1.msra.mxu0 0.0
  %510 = vmatprep.subr.mxu0 0.0
  %511 = vmatpush1.msra.mxu0 0.0
  %512 = vmatprep.subr.mxu0 0.0
  %513 = vmatpush1.msra.mxu0 0.0
  %514 = vmatprep.subr.mxu0 0.0
  %515 = vmatpush1.msra.mxu0 0.0
  %516 = vmatprep.mubr.f32.mxu0 0.0
  %517 = vmatmul.mubr.f32.gmra.mrb[0].mxu0 %v372
  %v518 = vpop.f32.mrb[0].mxu0
  %v519 = vadd.f32 0.0, %v518
  %v520 = vpop.f32.mrb[0].mxu0
  %521 = vmatprep.mubr.f32.mxu0 0.0
  %522 = vmatmul.mubr.f32.gmra.mrb[0].mxu0 %v375
  %v523 = vpop.f32.mrb[0].mxu0
  %v524 = vadd.f32 0.0, %v523
  %v525 = vpop.f32.mrb[0].mxu0
  %526 = vdwg.mxu0
  %v527 = vsub.f32 %v36, %v519
  %v528 = vsub.f32 %v37, %v524
  %529 = vst.msk [vmem:[%s4] sm:$0xff] %vm48, %v444
  %530 = vst.msk [vmem:[%s4 + $0x8] sm:$0xff] %vm48, %v449
  %531 = vst.msk [vmem:[%s5] sm:$0xff] %vm48, %v527
  %532 = vst.msk [vmem:[%s5 + $0x8] sm:$0xff] %vm48, %v528
  %v533 = vadd.f32 %v444, %v527
  %v534 = vadd.f32 %v449, %v528
  %v535 = vmax.f32 %v533, 0.0
  %v536 = vmax.f32 %v534, 0.0
  %v537 = vmin.f32 %v535, 1.0
  %v538 = vmin.f32 %v536, 1.0
  %539 = vst.msk [vmem:[%s6] sm:$0xff] %vm48, %v537
  %540 = vst.msk [vmem:[%s6 + $0x8] sm:$0xff] %vm48, %v538
  %541 = vmatprep.subr.mxu0 0.0
  %542 = vmatpush1.msra.mxu0 %v162
  %543 = vmatprep.subr.mxu0 0.0
  %544 = vmatpush1.msra.mxu0 %v167
  %545 = vmatprep.subr.mxu0 0.0
  %546 = vmatpush1.msra.mxu0 0.0
  %547 = vmatprep.subr.mxu0 0.0
  %548 = vmatpush1.msra.mxu0 0.0
  %549 = vmatprep.subr.mxu0 0.0
  %550 = vmatpush1.msra.mxu0 0.0
  %551 = vmatprep.subr.mxu0 0.0
  %552 = vmatpush1.msra.mxu0 0.0
  %553 = vmatprep.subr.mxu0 0.0
  %554 = vmatpush1.msra.mxu0 0.0
  %555 = vmatprep.subr.mxu0 0.0
  %556 = vmatpush1.msra.mxu0 0.0
  %557 = vmatprep.subr.mxu0 0.0
  %558 = vmatpush1.msra.mxu0 0.0
  %559 = vmatprep.subr.mxu0 0.0
  %560 = vmatpush1.msra.mxu0 0.0
  %561 = vmatprep.subr.mxu0 0.0
  %562 = vmatpush1.msra.mxu0 0.0
  %563 = vmatprep.subr.mxu0 0.0
  %564 = vmatpush1.msra.mxu0 0.0
  %565 = vmatprep.subr.mxu0 0.0
  %566 = vmatpush1.msra.mxu0 0.0
  %567 = vmatprep.subr.mxu0 0.0
  %568 = vmatpush1.msra.mxu0 0.0
  %569 = vmatprep.subr.mxu0 0.0
  %570 = vmatpush1.msra.mxu0 0.0
  %571 = vmatprep.subr.mxu0 0.0
  %572 = vmatpush1.msra.mxu0 0.0
  %573 = vmatprep.subr.mxu0 0.0
  %574 = vmatpush1.msra.mxu0 0.0
  %575 = vmatprep.subr.mxu0 0.0
  %576 = vmatpush1.msra.mxu0 0.0
  %577 = vmatprep.subr.mxu0 0.0
  %578 = vmatpush1.msra.mxu0 0.0
  %579 = vmatprep.subr.mxu0 0.0
  %580 = vmatpush1.msra.mxu0 0.0
  %581 = vmatprep.subr.mxu0 0.0
  %582 = vmatpush1.msra.mxu0 0.0
  %583 = vmatprep.subr.mxu0 0.0
  %584 = vmatpush1.msra.mxu0 0.0
  %585 = vmatprep.subr.mxu0 0.0
  %586 = vmatpush1.msra.mxu0 0.0
  %587 = vmatprep.subr.mxu0 0.0
  %588 = vmatpush1.msra.mxu0 0.0
  %589 = vmatprep.subr.mxu0 0.0
  %590 = vmatpush1.msra.mxu0 0.0
  %591 = vmatprep.subr.mxu0 0.0
  %592 = vmatpush1.msra.mxu0 0.0
  %593 = vmatprep.subr.mxu0 0.0
  %594 = vmatpush1.msra.mxu0 0.0
  %595 = vmatprep.subr.mxu0 0.0
  %596 = vmatpush1.msra.mxu0 0.0
  %597 = vmatprep.subr.mxu0 0.0
  %598 = vmatpush1.msra.mxu0 0.0
  %599 = vmatprep.subr.mxu0 0.0
  %600 = vmatpush1.msra.mxu0 0.0
  %601 = vmatprep.subr.mxu0 0.0
  %602 = vmatpush1.msra.mxu0 0.0
  %603 = vmatprep.subr.mxu0 0.0
  %604 = vmatpush1.msra.mxu0 0.0
  %605 = vmatprep.mubr.f32.mxu0 0.0
  %606 = vmatmul.mubr.f32.gmra.mrb[0].mxu0 %v372
  %v607 = vpop.f32.mrb[0].mxu0
  %v608 = vadd.f32 0.0, %v607
  %v609 = vpop.f32.mrb[0].mxu0
  %610 = vmatprep.mubr.f32.mxu0 0.0
  %611 = vmatmul.mubr.f32.gmra.mrb[0].mxu0 %v375
  %v612 = vpop.f32.mrb[0].mxu0
  %v613 = vadd.f32 0.0, %v612
  %v614 = vpop.f32.mrb[0].mxu0
  %615 = vdwg.mxu0
  %616 = vmatprep.subr.mxu0 0.0
  %617 = vmatpush1.msra.mxu0 %v323
  %618 = vmatprep.subr.mxu0 0.0
  %619 = vmatpush1.msra.mxu0 %v328
  %620 = vmatprep.subr.mxu0 0.0
  %621 = vmatpush1.msra.mxu0 0.0
  %622 = vmatprep.subr.mxu0 0.0
  %623 = vmatpush1.msra.mxu0 0.0
  %624 = vmatprep.subr.mxu0 0.0
  %625 = vmatpush1.msra.mxu0 0.0
  %626 = vmatprep.subr.mxu0 0.0
  %627 = vmatpush1.msra.mxu0 0.0
  %628 = vmatprep.subr.mxu0 0.0
  %629 = vmatpush1.msra.mxu0 0.0
  %630 = vmatprep.subr.mxu0 0.0
  %631 = vmatpush1.msra.mxu0 0.0
  %632 = vmatprep.subr.mxu0 0.0
  %633 = vmatpush1.msra.mxu0 0.0
  %634 = vmatprep.subr.mxu0 0.0
  %635 = vmatpush1.msra.mxu0 0.0
  %636 = vmatprep.subr.mxu0 0.0
  %637 = vmatpush1.msra.mxu0 0.0
  %638 = vmatprep.subr.mxu0 0.0
  %639 = vmatpush1.msra.mxu0 0.0
  %640 = vmatprep.subr.mxu0 0.0
  %641 = vmatpush1.msra.mxu0 0.0
  %642 = vmatprep.subr.mxu0 0.0
  %643 = vmatpush1.msra.mxu0 0.0
  %644 = vmatprep.subr.mxu0 0.0
  %645 = vmatpush1.msra.mxu0 0.0
  %646 = vmatprep.subr.mxu0 0.0
  %647 = vmatpush1.msra.mxu0 0.0
  %648 = vmatprep.subr.mxu0 0.0
  %649 = vmatpush1.msra.mxu0 0.0
  %650 = vmatprep.subr.mxu0 0.0
  %651 = vmatpush1.msra.mxu0 0.0
  %652 = vmatprep.subr.mxu0 0.0
  %653 = vmatpush1.msra.mxu0 0.0
  %654 = vmatprep.subr.mxu0 0.0
  %655 = vmatpush1.msra.mxu0 0.0
  %656 = vmatprep.subr.mxu0 0.0
  %657 = vmatpush1.msra.mxu0 0.0
  %658 = vmatprep.subr.mxu0 0.0
  %659 = vmatpush1.msra.mxu0 0.0
  %660 = vmatprep.subr.mxu0 0.0
  %661 = vmatpush1.msra.mxu0 0.0
  %662 = vmatprep.subr.mxu0 0.0
  %663 = vmatpush1.msra.mxu0 0.0
  %664 = vmatprep.subr.mxu0 0.0
  %665 = vmatpush1.msra.mxu0 0.0
  %666 = vmatprep.subr.mxu0 0.0
  %667 = vmatpush1.msra.mxu0 0.0
  %668 = vmatprep.subr.mxu0 0.0
  %669 = vmatpush1.msra.mxu0 0.0
  %670 = vmatprep.subr.mxu0 0.0
  %671 = vmatpush1.msra.mxu0 0.0
  %672 = vmatprep.subr.mxu0 0.0
  %673 = vmatpush1.msra.mxu0 0.0
  %674 = vmatprep.subr.mxu0 0.0
  %675 = vmatpush1.msra.mxu0 0.0
  %676 = vmatprep.subr.mxu0 0.0
  %677 = vmatpush1.msra.mxu0 0.0
  %678 = vmatprep.subr.mxu0 0.0
  %679 = vmatpush1.msra.mxu0 0.0
  %680 = vmatprep.mubr.f32.mxu0 0.0
  %681 = vmatmul.mubr.f32.gmra.mrb[0].mxu0 %v372
  %v682 = vpop.f32.mrb[0].mxu0
  %v683 = vadd.f32 0.0, %v682
  %v684 = vpop.f32.mrb[0].mxu0
  %685 = vmatprep.mubr.f32.mxu0 0.0
  %686 = vmatmul.mubr.f32.gmra.mrb[0].mxu0 %v375
  %v687 = vpop.f32.mrb[0].mxu0
  %v688 = vadd.f32 0.0, %v687
  %v689 = vpop.f32.mrb[0].mxu0
  %690 = vdwg.mxu0
  %v691 = vsub.f32 %v38, %v683
  %v692 = vsub.f32 %v39, %v688
  %693 = vst.msk [vmem:[%s4 + $0x10] sm:$0xff] %vm48, %v608
  %694 = vst.msk [vmem:[%s4 + $0x18] sm:$0xff] %vm48, %v613
  %695 = vst.msk [vmem:[%s5 + $0x10] sm:$0xff] %vm48, %v691
  %696 = vst.msk [vmem:[%s5 + $0x18] sm:$0xff] %vm48, %v692
  %v697 = vadd.f32 %v608, %v691
  %v698 = vadd.f32 %v613, %v692
  %v699 = vmax.f32 %v697, 0.0
  %v700 = vmax.f32 %v698, 0.0
  %v701 = vmin.f32 %v699, 1.0
  %v702 = vmin.f32 %v700, 1.0
  %703 = vst.msk [vmem:[%s6 + $0x10] sm:$0xff] %vm48, %v701
  %704 = vst.msk [vmem:[%s6 + $0x18] sm:$0xff] %vm48, %v702
  %705 = vmatprep.subr.mxu0 0.0
  %706 = vmatpush1.msra.mxu0 %v172
  %707 = vmatprep.subr.mxu0 0.0
  %708 = vmatpush1.msra.mxu0 %v177
  %709 = vmatprep.subr.mxu0 0.0
  %710 = vmatpush1.msra.mxu0 0.0
  %711 = vmatprep.subr.mxu0 0.0
  %712 = vmatpush1.msra.mxu0 0.0
  %713 = vmatprep.subr.mxu0 0.0
  %714 = vmatpush1.msra.mxu0 0.0
  %715 = vmatprep.subr.mxu0 0.0
  %716 = vmatpush1.msra.mxu0 0.0
  %717 = vmatprep.subr.mxu0 0.0
  %718 = vmatpush1.msra.mxu0 0.0
  %719 = vmatprep.subr.mxu0 0.0
  %720 = vmatpush1.msra.mxu0 0.0
  %721 = vmatprep.subr.mxu0 0.0
  %722 = vmatpush1.msra.mxu0 0.0
  %723 = vmatprep.subr.mxu0 0.0
  %724 = vmatpush1.msra.mxu0 0.0
  %725 = vmatprep.subr.mxu0 0.0
  %726 = vmatpush1.msra.mxu0 0.0
  %727 = vmatprep.subr.mxu0 0.0
  %728 = vmatpush1.msra.mxu0 0.0
  %729 = vmatprep.subr.mxu0 0.0
  %730 = vmatpush1.msra.mxu0 0.0
  %731 = vmatprep.subr.mxu0 0.0
  %732 = vmatpush1.msra.mxu0 0.0
  %733 = vmatprep.subr.mxu0 0.0
  %734 = vmatpush1.msra.mxu0 0.0
  %735 = vmatprep.subr.mxu0 0.0
  %736 = vmatpush1.msra.mxu0 0.0
  %737 = vmatprep.subr.mxu0 0.0
  %738 = vmatpush1.msra.mxu0 0.0
  %739 = vmatprep.subr.mxu0 0.0
  %740 = vmatpush1.msra.mxu0 0.0
  %741 = vmatprep.subr.mxu0 0.0
  %742 = vmatpush1.msra.mxu0 0.0
  %743 = vmatprep.subr.mxu0 0.0
  %744 = vmatpush1.msra.mxu0 0.0
  %745 = vmatprep.subr.mxu0 0.0
  %746 = vmatpush1.msra.mxu0 0.0
  %747 = vmatprep.subr.mxu0 0.0
  %748 = vmatpush1.msra.mxu0 0.0
  %749 = vmatprep.subr.mxu0 0.0
  %750 = vmatpush1.msra.mxu0 0.0
  %751 = vmatprep.subr.mxu0 0.0
  %752 = vmatpush1.msra.mxu0 0.0
  %753 = vmatprep.subr.mxu0 0.0
  %754 = vmatpush1.msra.mxu0 0.0
  %755 = vmatprep.subr.mxu0 0.0
  %756 = vmatpush1.msra.mxu0 0.0
  %757 = vmatprep.subr.mxu0 0.0
  %758 = vmatpush1.msra.mxu0 0.0
  %759 = vmatprep.subr.mxu0 0.0
  %760 = vmatpush1.msra.mxu0 0.0
  %761 = vmatprep.subr.mxu0 0.0
  %762 = vmatpush1.msra.mxu0 0.0
  %763 = vmatprep.subr.mxu0 0.0
  %764 = vmatpush1.msra.mxu0 0.0
  %765 = vmatprep.subr.mxu0 0.0
  %766 = vmatpush1.msra.mxu0 0.0
  %767 = vmatprep.subr.mxu0 0.0
  %768 = vmatpush1.msra.mxu0 0.0
  %769 = vmatprep.mubr.f32.mxu0 0.0
  %770 = vmatmul.mubr.f32.gmra.mrb[0].mxu0 %v372
  %v771 = vpop.f32.mrb[0].mxu0
  %v772 = vadd.f32 0.0, %v771
  %v773 = vpop.f32.mrb[0].mxu0
  %774 = vmatprep.mubr.f32.mxu0 0.0
  %775 = vmatmul.mubr.f32.gmra.mrb[0].mxu0 %v375
  %v776 = vpop.f32.mrb[0].mxu0
  %v777 = vadd.f32 0.0, %v776
  %v778 = vpop.f32.mrb[0].mxu0
  %779 = vdwg.mxu0
  %780 = vmatprep.subr.mxu0 0.0
  %781 = vmatpush1.msra.mxu0 %v333
  %782 = vmatprep.subr.mxu0 0.0
  %783 = vmatpush1.msra.mxu0 %v338
  %784 = vmatprep.subr.mxu0 0.0
  %785 = vmatpush1.msra.mxu0 0.0
  %786 = vmatprep.subr.mxu0 0.0
  %787 = vmatpush1.msra.mxu0 0.0
  %788 = vmatprep.subr.mxu0 0.0
  %789 = vmatpush1.msra.mxu0 0.0
  %790 = vmatprep.subr.mxu0 0.0
  %791 = vmatpush1.msra.mxu0 0.0
  %792 = vmatprep.subr.mxu0 0.0
  %793 = vmatpush1.msra.mxu0 0.0
  %794 = vmatprep.subr.mxu0 0.0
  %795 = vmatpush1.msra.mxu0 0.0
  %796 = vmatprep.subr.mxu0 0.0
  %797 = vmatpush1.msra.mxu0 0.0
  %798 = vmatprep.subr.mxu0 0.0
  %799 = vmatpush1.msra.mxu0 0.0
  %800 = vmatprep.subr.mxu0 0.0
  %801 = vmatpush1.msra.mxu0 0.0
  %802 = vmatprep.subr.mxu0 0.0
  %803 = vmatpush1.msra.mxu0 0.0
  %804 = vmatprep.subr.mxu0 0.0
  %805 = vmatpush1.msra.mxu0 0.0
  %806 = vmatprep.subr.mxu0 0.0
  %807 = vmatpush1.msra.mxu0 0.0
  %808 = vmatprep.subr.mxu0 0.0
  %809 = vmatpush1.msra.mxu0 0.0
  %810 = vmatprep.subr.mxu0 0.0
  %811 = vmatpush1.msra.mxu0 0.0
  %812 = vmatprep.subr.mxu0 0.0
  %813 = vmatpush1.msra.mxu0 0.0
  %814 = vmatprep.subr.mxu0 0.0
  %815 = vmatpush1.msra.mxu0 0.0
  %816 = vmatprep.subr.mxu0 0.0
  %817 = vmatpush1.msra.mxu0 0.0
  %818 = vmatprep.subr.mxu0 0.0
  %819 = vmatpush1.msra.mxu0 0.0
  %820 = vmatprep.subr.mxu0 0.0
  %821 = vmatpush1.msra.mxu0 0.0
  %822 = vmatprep.subr.mxu0 0.0
  %823 = vmatpush1.msra.mxu0 0.0
  %824 = vmatprep.subr.mxu0 0.0
  %825 = vmatpush1.msra.mxu0 0.0
  %826 = vmatprep.subr.mxu0 0.0
  %827 = vmatpush1.msra.mxu0 0.0
  %828 = vmatprep.subr.mxu0 0.0
  %829 = vmatpush1.msra.mxu0 0.0
  %830 = vmatprep.subr.mxu0 0.0
  %831 = vmatpush1.msra.mxu0 0.0
  %832 = vmatprep.subr.mxu0 0.0
  %833 = vmatpush1.msra.mxu0 0.0
  %834 = vmatprep.subr.mxu0 0.0
  %835 = vmatpush1.msra.mxu0 0.0
  %836 = vmatprep.subr.mxu0 0.0
  %837 = vmatpush1.msra.mxu0 0.0
  %838 = vmatprep.subr.mxu0 0.0
  %839 = vmatpush1.msra.mxu0 0.0
  %840 = vmatprep.subr.mxu0 0.0
  %841 = vmatpush1.msra.mxu0 0.0
  %842 = vmatprep.subr.mxu0 0.0
  %843 = vmatpush1.msra.mxu0 0.0
  %844 = vmatprep.mubr.f32.mxu0 0.0
  %845 = vmatmul.mubr.f32.gmra.mrb[0].mxu0 %v372
  %v846 = vpop.f32.mrb[0].mxu0
  %v847 = vadd.f32 0.0, %v846
  %v848 = vpop.f32.mrb[0].mxu0
  %849 = vmatprep.mubr.f32.mxu0 0.0
  %850 = vmatmul.mubr.f32.gmra.mrb[0].mxu0 %v375
  %v851 = vpop.f32.mrb[0].mxu0
  %v852 = vadd.f32 0.0, %v851
  %v853 = vpop.f32.mrb[0].mxu0
  %854 = vdwg.mxu0
  %v855 = vsub.f32 %v40, %v847
  %v856 = vsub.f32 %v41, %v852
  %857 = vst.msk [vmem:[%s4 + $0x20] sm:$0xff] %vm48, %v772
  %858 = vst.msk [vmem:[%s4 + $0x28] sm:$0xff] %vm48, %v777
  %859 = vst.msk [vmem:[%s5 + $0x20] sm:$0xff] %vm48, %v855
  %860 = vst.msk [vmem:[%s5 + $0x28] sm:$0xff] %vm48, %v856
  %v861 = vadd.f32 %v772, %v855
  %v862 = vadd.f32 %v777, %v856
  %v863 = vmax.f32 %v861, 0.0
  %v864 = vmax.f32 %v862, 0.0
  %v865 = vmin.f32 %v863, 1.0
  %v866 = vmin.f32 %v864, 1.0
  %867 = vst.msk [vmem:[%s6 + $0x20] sm:$0xff] %vm48, %v865
  %868 = vst.msk [vmem:[%s6 + $0x28] sm:$0xff] %vm48, %v866
  %869 = vmatprep.subr.mxu0 0.0
  %870 = vmatpush1.msra.mxu0 %v182
  %871 = vmatprep.subr.mxu0 0.0
  %872 = vmatpush1.msra.mxu0 %v187
  %873 = vmatprep.subr.mxu0 0.0
  %874 = vmatpush1.msra.mxu0 0.0
  %875 = vmatprep.subr.mxu0 0.0
  %876 = vmatpush1.msra.mxu0 0.0
  %877 = vmatprep.subr.mxu0 0.0
  %878 = vmatpush1.msra.mxu0 0.0
  %879 = vmatprep.subr.mxu0 0.0
  %880 = vmatpush1.msra.mxu0 0.0
  %881 = vmatprep.subr.mxu0 0.0
  %882 = vmatpush1.msra.mxu0 0.0
  %883 = vmatprep.subr.mxu0 0.0
  %884 = vmatpush1.msra.mxu0 0.0
  %885 = vmatprep.subr.mxu0 0.0
  %886 = vmatpush1.msra.mxu0 0.0
  %887 = vmatprep.subr.mxu0 0.0
  %888 = vmatpush1.msra.mxu0 0.0
  %889 = vmatprep.subr.mxu0 0.0
  %890 = vmatpush1.msra.mxu0 0.0
  %891 = vmatprep.subr.mxu0 0.0
  %892 = vmatpush1.msra.mxu0 0.0
  %893 = vmatprep.subr.mxu0 0.0
  %894 = vmatpush1.msra.mxu0 0.0
  %895 = vmatprep.subr.mxu0 0.0
  %896 = vmatpush1.msra.mxu0 0.0
  %897 = vmatprep.subr.mxu0 0.0
  %898 = vmatpush1.msra.mxu0 0.0
  %899 = vmatprep.subr.mxu0 0.0
  %900 = vmatpush1.msra.mxu0 0.0
  %901 = vmatprep.subr.mxu0 0.0
  %902 = vmatpush1.msra.mxu0 0.0
  %903 = vmatprep.subr.mxu0 0.0
  %904 = vmatpush1.msra.mxu0 0.0
  %905 = vmatprep.subr.mxu0 0.0
  %906 = vmatpush1.msra.mxu0 0.0
  %907 = vmatprep.subr.mxu0 0.0
  %908 = vmatpush1.msra.mxu0 0.0
  %909 = vmatprep.subr.mxu0 0.0
  %910 = vmatpush1.msra.mxu0 0.0
  %911 = vmatprep.subr.mxu0 0.0
  %912 = vmatpush1.msra.mxu0 0.0
  %913 = vmatprep.subr.mxu0 0.0
  %914 = vmatpush1.msra.mxu0 0.0
  %915 = vmatprep.subr.mxu0 0.0
  %916 = vmatpush1.msra.mxu0 0.0
  %917 = vmatprep.subr.mxu0 0.0
  %918 = vmatpush1.msra.mxu0 0.0
  %919 = vmatprep.subr.mxu0 0.0
  %920 = vmatpush1.msra.mxu0 0.0
  %921 = vmatprep.subr.mxu0 0.0
  %922 = vmatpush1.msra.mxu0 0.0
  %923 = vmatprep.subr.mxu0 0.0
  %924 = vmatpush1.msra.mxu0 0.0
  %925 = vmatprep.subr.mxu0 0.0
  %926 = vmatpush1.msra.mxu0 0.0
  %927 = vmatprep.subr.mxu0 0.0
  %928 = vmatpush1.msra.mxu0 0.0
  %929 = vmatprep.subr.mxu0 0.0
  %930 = vmatpush1.msra.mxu0 0.0
  %931 = vmatprep.subr.mxu0 0.0
  %932 = vmatpush1.msra.mxu0 0.0
  %933 = vmatprep.mubr.f32.mxu0 0.0
  %934 = vmatmul.mubr.f32.gmra.mrb[0].mxu0 %v372
  %v935 = vpop.f32.mrb[0].mxu0
  %v936 = vadd.f32 0.0, %v935
  %v937 = vpop.f32.mrb[0].mxu0
  %938 = vmatprep.mubr.f32.mxu0 0.0
  %939 = vmatmul.mubr.f32.gmra.mrb[0].mxu0 %v375
  %v940 = vpop.f32.mrb[0].mxu0
  %v941 = vadd.f32 0.0, %v940
  %v942 = vpop.f32.mrb[0].mxu0
  %943 = vdwg.mxu0
  %944 = vmatprep.subr.mxu0 0.0
  %945 = vmatpush1.msra.mxu0 %v343
  %946 = vmatprep.subr.mxu0 0.0
  %947 = vmatpush1.msra.mxu0 %v348
  %948 = vmatprep.subr.mxu0 0.0
  %949 = vmatpush1.msra.mxu0 0.0
  %950 = vmatprep.subr.mxu0 0.0
  %951 = vmatpush1.msra.mxu0 0.0
  %952 = vmatprep.subr.mxu0 0.0
  %953 = vmatpush1.msra.mxu0 0.0
  %954 = vmatprep.subr.mxu0 0.0
  %955 = vmatpush1.msra.mxu0 0.0
  %956 = vmatprep.subr.mxu0 0.0
  %957 = vmatpush1.msra.mxu0 0.0
  %958 = vmatprep.subr.mxu0 0.0
  %959 = vmatpush1.msra.mxu0 0.0
  %960 = vmatprep.subr.mxu0 0.0
  %961 = vmatpush1.msra.mxu0 0.0
  %962 = vmatprep.subr.mxu0 0.0
  %963 = vmatpush1.msra.mxu0 0.0
  %964 = vmatprep.subr.mxu0 0.0
  %965 = vmatpush1.msra.mxu0 0.0
  %966 = vmatprep.subr.mxu0 0.0
  %967 = vmatpush1.msra.mxu0 0.0
  %968 = vmatprep.subr.mxu0 0.0
  %969 = vmatpush1.msra.mxu0 0.0
  %970 = vmatprep.subr.mxu0 0.0
  %971 = vmatpush1.msra.mxu0 0.0
  %972 = vmatprep.subr.mxu0 0.0
  %973 = vmatpush1.msra.mxu0 0.0
  %974 = vmatprep.subr.mxu0 0.0
  %975 = vmatpush1.msra.mxu0 0.0
  %976 = vmatprep.subr.mxu0 0.0
  %977 = vmatpush1.msra.mxu0 0.0
  %978 = vmatprep.subr.mxu0 0.0
  %979 = vmatpush1.msra.mxu0 0.0
  %980 = vmatprep.subr.mxu0 0.0
  %981 = vmatpush1.msra.mxu0 0.0
  %982 = vmatprep.subr.mxu0 0.0
  %983 = vmatpush1.msra.mxu0 0.0
  %984 = vmatprep.subr.mxu0 0.0
  %985 = vmatpush1.msra.mxu0 0.0
  %986 = vmatprep.subr.mxu0 0.0
  %987 = vmatpush1.msra.mxu0 0.0
  %988 = vmatprep.subr.mxu0 0.0
  %989 = vmatpush1.msra.mxu0 0.0
  %990 = vmatprep.subr.mxu0 0.0
  %991 = vmatpush1.msra.mxu0 0.0
  %992 = vmatprep.subr.mxu0 0.0
  %993 = vmatpush1.msra.mxu0 0.0
  %994 = vmatprep.subr.mxu0 0.0
  %995 = vmatpush1.msra.mxu0 0.0
  %996 = vmatprep.subr.mxu0 0.0
  %997 = vmatpush1.msra.mxu0 0.0
  %998 = vmatprep.subr.mxu0 0.0
  %999 = vmatpush1.msra.mxu0 0.0
  %1000 = vmatprep.subr.mxu0 0.0
  %1001 = vmatpush1.msra.mxu0 0.0
  %1002 = vmatprep.subr.mxu0 0.0
  %1003 = vmatpush1.msra.mxu0 0.0
  %1004 = vmatprep.subr.mxu0 0.0
  %1005 = vmatpush1.msra.mxu0 0.0
  %1006 = vmatprep.subr.mxu0 0.0
  %1007 = vmatpush1.msra.mxu0 0.0
  %1008 = vmatprep.mubr.f32.mxu0 0.0
  %1009 = vmatmul.mubr.f32.gmra.mrb[0].mxu0 %v372
  %v1010 = vpop.f32.mrb[0].mxu0
  %v1011 = vadd.f32 0.0, %v1010
  %v1012 = vpop.f32.mrb[0].mxu0
  %1013 = vmatprep.mubr.f32.mxu0 0.0
  %1014 = vmatmul.mubr.f32.gmra.mrb[0].mxu0 %v375
  %v1015 = vpop.f32.mrb[0].mxu0
  %v1016 = vadd.f32 0.0, %v1015
  %v1017 = vpop.f32.mrb[0].mxu0
  %1018 = vdwg.mxu0
  %v1019 = vsub.f32 %v42, %v1011
  %v1020 = vsub.f32 %v43, %v1016
  %1021 = vst.msk [vmem:[%s4 + $0x30] sm:$0xff] %vm48, %v936
  %1022 = vst.msk [vmem:[%s4 + $0x38] sm:$0xff] %vm48, %v941
  %1023 = vst.msk [vmem:[%s5 + $0x30] sm:$0xff] %vm48, %v1019
  %1024 = vst.msk [vmem:[%s5 + $0x38] sm:$0xff] %vm48, %v1020
  %v1025 = vadd.f32 %v936, %v1019
  %v1026 = vadd.f32 %v941, %v1020
  %v1027 = vmax.f32 %v1025, 0.0
  %v1028 = vmax.f32 %v1026, 0.0
  %v1029 = vmin.f32 %v1027, 1.0
  %v1030 = vmin.f32 %v1028, 1.0
  %1031 = vst.msk [vmem:[%s6 + $0x30] sm:$0xff] %vm48, %v1029
  %1032 = vst.msk [vmem:[%s6 + $0x38] sm:$0xff] %vm48, %v1030
  %1033 = vmatprep.subr.mxu0 0.0
  %1034 = vmatpush1.msra.mxu0 %v192
  %1035 = vmatprep.subr.mxu0 0.0
  %1036 = vmatpush1.msra.mxu0 %v197
  %1037 = vmatprep.subr.mxu0 0.0
  %1038 = vmatpush1.msra.mxu0 0.0
  %1039 = vmatprep.subr.mxu0 0.0
  %1040 = vmatpush1.msra.mxu0 0.0
  %1041 = vmatprep.subr.mxu0 0.0
  %1042 = vmatpush1.msra.mxu0 0.0
  %1043 = vmatprep.subr.mxu0 0.0
  %1044 = vmatpush1.msra.mxu0 0.0
  %1045 = vmatprep.subr.mxu0 0.0
  %1046 = vmatpush1.msra.mxu0 0.0
  %1047 = vmatprep.subr.mxu0 0.0
  %1048 = vmatpush1.msra.mxu0 0.0
  %1049 = vmatprep.subr.mxu0 0.0
  %1050 = vmatpush1.msra.mxu0 0.0
  %1051 = vmatprep.subr.mxu0 0.0
  %1052 = vmatpush1.msra.mxu0 0.0
  %1053 = vmatprep.subr.mxu0 0.0
  %1054 = vmatpush1.msra.mxu0 0.0
  %1055 = vmatprep.subr.mxu0 0.0
  %1056 = vmatpush1.msra.mxu0 0.0
  %1057 = vmatprep.subr.mxu0 0.0
  %1058 = vmatpush1.msra.mxu0 0.0
  %1059 = vmatprep.subr.mxu0 0.0
  %1060 = vmatpush1.msra.mxu0 0.0
  %1061 = vmatprep.subr.mxu0 0.0
  %1062 = vmatpush1.msra.mxu0 0.0
  %1063 = vmatprep.subr.mxu0 0.0
  %1064 = vmatpush1.msra.mxu0 0.0
  %1065 = vmatprep.subr.mxu0 0.0
  %1066 = vmatpush1.msra.mxu0 0.0
  %1067 = vmatprep.subr.mxu0 0.0
  %1068 = vmatpush1.msra.mxu0 0.0
  %1069 = vmatprep.subr.mxu0 0.0
  %1070 = vmatpush1.msra.mxu0 0.0
  %1071 = vmatprep.subr.mxu0 0.0
  %1072 = vmatpush1.msra.mxu0 0.0
  %1073 = vmatprep.subr.mxu0 0.0
  %1074 = vmatpush1.msra.mxu0 0.0
  %1075 = vmatprep.subr.mxu0 0.0
  %1076 = vmatpush1.msra.mxu0 0.0
  %1077 = vmatprep.subr.mxu0 0.0
  %1078 = vmatpush1.msra.mxu0 0.0
  %1079 = vmatprep.subr.mxu0 0.0
  %1080 = vmatpush1.msra.mxu0 0.0
  %1081 = vmatprep.subr.mxu0 0.0
  %1082 = vmatpush1.msra.mxu0 0.0
  %1083 = vmatprep.subr.mxu0 0.0
  %1084 = vmatpush1.msra.mxu0 0.0
  %1085 = vmatprep.subr.mxu0 0.0
  %1086 = vmatpush1.msra.mxu0 0.0
  %1087 = vmatprep.subr.mxu0 0.0
  %1088 = vmatpush1.msra.mxu0 0.0
  %1089 = vmatprep.subr.mxu0 0.0
  %1090 = vmatpush1.msra.mxu0 0.0
  %1091 = vmatprep.subr.mxu0 0.0
  %1092 = vmatpush1.msra.mxu0 0.0
  %1093 = vmatprep.subr.mxu0 0.0
  %1094 = vmatpush1.msra.mxu0 0.0
  %1095 = vmatprep.subr.mxu0 0.0
  %1096 = vmatpush1.msra.mxu0 0.0
  %1097 = vmatprep.mubr.f32.mxu0 0.0
  %1098 = vmatmul.mubr.f32.gmra.mrb[0].mxu0 %v372
  %v1099 = vpop.f32.mrb[0].mxu0
  %v1100 = vadd.f32 0.0, %v1099
  %v1101 = vpop.f32.mrb[0].mxu0
  %1102 = vmatprep.mubr.f32.mxu0 0.0
  %1103 = vmatmul.mubr.f32.gmra.mrb[0].mxu0 %v375
  %v1104 = vpop.f32.mrb[0].mxu0
  %v1105 = vadd.f32 0.0, %v1104
  %v1106 = vpop.f32.mrb[0].mxu0
  %1107 = vdwg.mxu0
  %1108 = vmatprep.subr.mxu0 0.0
  %1109 = vmatpush1.msra.mxu0 %v353
  %1110 = vmatprep.subr.mxu0 0.0
  %1111 = vmatpush1.msra.mxu0 %v358
  %1112 = vmatprep.subr.mxu0 0.0
  %1113 = vmatpush1.msra.mxu0 0.0
  %1114 = vmatprep.subr.mxu0 0.0
  %1115 = vmatpush1.msra.mxu0 0.0
  %1116 = vmatprep.subr.mxu0 0.0
  %1117 = vmatpush1.msra.mxu0 0.0
  %1118 = vmatprep.subr.mxu0 0.0
  %1119 = vmatpush1.msra.mxu0 0.0
  %1120 = vmatprep.subr.mxu0 0.0
  %1121 = vmatpush1.msra.mxu0 0.0
  %1122 = vmatprep.subr.mxu0 0.0
  %1123 = vmatpush1.msra.mxu0 0.0
  %1124 = vmatprep.subr.mxu0 0.0
  %1125 = vmatpush1.msra.mxu0 0.0
  %1126 = vmatprep.subr.mxu0 0.0
  %1127 = vmatpush1.msra.mxu0 0.0
  %1128 = vmatprep.subr.mxu0 0.0
  %1129 = vmatpush1.msra.mxu0 0.0
  %1130 = vmatprep.subr.mxu0 0.0
  %1131 = vmatpush1.msra.mxu0 0.0
  %1132 = vmatprep.subr.mxu0 0.0
  %1133 = vmatpush1.msra.mxu0 0.0
  %1134 = vmatprep.subr.mxu0 0.0
  %1135 = vmatpush1.msra.mxu0 0.0
  %1136 = vmatprep.subr.mxu0 0.0
  %1137 = vmatpush1.msra.mxu0 0.0
  %1138 = vmatprep.subr.mxu0 0.0
  %1139 = vmatpush1.msra.mxu0 0.0
  %1140 = vmatprep.subr.mxu0 0.0
  %1141 = vmatpush1.msra.mxu0 0.0
  %1142 = vmatprep.subr.mxu0 0.0
  %1143 = vmatpush1.msra.mxu0 0.0
  %1144 = vmatprep.subr.mxu0 0.0
  %1145 = vmatpush1.msra.mxu0 0.0
  %1146 = vmatprep.subr.mxu0 0.0
  %1147 = vmatpush1.msra.mxu0 0.0
  %1148 = vmatprep.subr.mxu0 0.0
  %1149 = vmatpush1.msra.mxu0 0.0
  %1150 = vmatprep.subr.mxu0 0.0
  %1151 = vmatpush1.msra.mxu0 0.0
  %1152 = vmatprep.subr.mxu0 0.0
  %1153 = vmatpush1.msra.mxu0 0.0
  %1154 = vmatprep.subr.mxu0 0.0
  %1155 = vmatpush1.msra.mxu0 0.0
  %1156 = vmatprep.subr.mxu0 0.0
  %1157 = vmatpush1.msra.mxu0 0.0
  %1158 = vmatprep.subr.mxu0 0.0
  %1159 = vmatpush1.msra.mxu0 0.0
  %1160 = vmatprep.subr.mxu0 0.0
  %1161 = vmatpush1.msra.mxu0 0.0
  %1162 = vmatprep.subr.mxu0 0.0
  %1163 = vmatpush1.msra.mxu0 0.0
  %1164 = vmatprep.subr.mxu0 0.0
  %1165 = vmatpush1.msra.mxu0 0.0
  %1166 = vmatprep.subr.mxu0 0.0
  %1167 = vmatpush1.msra.mxu0 0.0
  %1168 = vmatprep.subr.mxu0 0.0
  %1169 = vmatpush1.msra.mxu0 0.0
  %1170 = vmatprep.subr.mxu0 0.0
  %1171 = vmatpush1.msra.mxu0 0.0
  %1172 = vmatprep.mubr.f32.mxu0 0.0
  %1173 = vmatmul.mubr.f32.gmra.mrb[0].mxu0 %v372
  %v1174 = vpop.f32.mrb[0].mxu0
  %v1175 = vadd.f32 0.0, %v1174
  %v1176 = vpop.f32.mrb[0].mxu0
  %1177 = vmatprep.mubr.f32.mxu0 0.0
  %1178 = vmatmul.mubr.f32.gmra.mrb[0].mxu0 %v375
  %v1179 = vpop.f32.mrb[0].mxu0
  %v1180 = vadd.f32 0.0, %v1179
  %v1181 = vpop.f32.mrb[0].mxu0
  %1182 = vdwg.mxu0
  %v1183 = vsub.f32 %v44, %v1175
  %v1184 = vsub.f32 %v45, %v1180
  %1185 = vst.msk [vmem:[%s4 + $0x40] sm:$0xff] %vm48, %v1100
  %1186 = vst.msk [vmem:[%s4 + $0x48] sm:$0xff] %vm48, %v1105
  %1187 = vst.msk [vmem:[%s5 + $0x40] sm:$0xff] %vm48, %v1183
  %1188 = vst.msk [vmem:[%s5 + $0x48] sm:$0xff] %vm48, %v1184
  %v1189 = vadd.f32 %v1100, %v1183
  %v1190 = vadd.f32 %v1105, %v1184
  %v1191 = vmax.f32 %v1189, 0.0
  %v1192 = vmax.f32 %v1190, 0.0
  %v1193 = vmin.f32 %v1191, 1.0
  %v1194 = vmin.f32 %v1192, 1.0
  %1195 = vst.msk [vmem:[%s6 + $0x40] sm:$0xff] %vm48, %v1193
  %1196 = vst.msk [vmem:[%s6 + $0x48] sm:$0xff] %vm48, %v1194
  %1197 = vmatprep.subr.mxu0 0.0
  %1198 = vmatpush1.msra.mxu0 %v202
  %1199 = vmatprep.subr.mxu0 0.0
  %1200 = vmatpush1.msra.mxu0 %v207
  %1201 = vmatprep.subr.mxu0 0.0
  %1202 = vmatpush1.msra.mxu0 0.0
  %1203 = vmatprep.subr.mxu0 0.0
  %1204 = vmatpush1.msra.mxu0 0.0
  %1205 = vmatprep.subr.mxu0 0.0
  %1206 = vmatpush1.msra.mxu0 0.0
  %1207 = vmatprep.subr.mxu0 0.0
  %1208 = vmatpush1.msra.mxu0 0.0
  %1209 = vmatprep.subr.mxu0 0.0
  %1210 = vmatpush1.msra.mxu0 0.0
  %1211 = vmatprep.subr.mxu0 0.0
  %1212 = vmatpush1.msra.mxu0 0.0
  %1213 = vmatprep.subr.mxu0 0.0
  %1214 = vmatpush1.msra.mxu0 0.0
  %1215 = vmatprep.subr.mxu0 0.0
  %1216 = vmatpush1.msra.mxu0 0.0
  %1217 = vmatprep.subr.mxu0 0.0
  %1218 = vmatpush1.msra.mxu0 0.0
  %1219 = vmatprep.subr.mxu0 0.0
  %1220 = vmatpush1.msra.mxu0 0.0
  %1221 = vmatprep.subr.mxu0 0.0
  %1222 = vmatpush1.msra.mxu0 0.0
  %1223 = vmatprep.subr.mxu0 0.0
  %1224 = vmatpush1.msra.mxu0 0.0
  %1225 = vmatprep.subr.mxu0 0.0
  %1226 = vmatpush1.msra.mxu0 0.0
  %1227 = vmatprep.subr.mxu0 0.0
  %1228 = vmatpush1.msra.mxu0 0.0
  %1229 = vmatprep.subr.mxu0 0.0
  %1230 = vmatpush1.msra.mxu0 0.0
  %1231 = vmatprep.subr.mxu0 0.0
  %1232 = vmatpush1.msra.mxu0 0.0
  %1233 = vmatprep.subr.mxu0 0.0
  %1234 = vmatpush1.msra.mxu0 0.0
  %1235 = vmatprep.subr.mxu0 0.0
  %1236 = vmatpush1.msra.mxu0 0.0
  %1237 = vmatprep.subr.mxu0 0.0
  %1238 = vmatpush1.msra.mxu0 0.0
  %1239 = vmatprep.subr.mxu0 0.0
  %1240 = vmatpush1.msra.mxu0 0.0
  %1241 = vmatprep.subr.mxu0 0.0
  %1242 = vmatpush1.msra.mxu0 0.0
  %1243 = vmatprep.subr.mxu0 0.0
  %1244 = vmatpush1.msra.mxu0 0.0
  %1245 = vmatprep.subr.mxu0 0.0
  %1246 = vmatpush1.msra.mxu0 0.0
  %1247 = vmatprep.subr.mxu0 0.0
  %1248 = vmatpush1.msra.mxu0 0.0
  %1249 = vmatprep.subr.mxu0 0.0
  %1250 = vmatpush1.msra.mxu0 0.0
  %1251 = vmatprep.subr.mxu0 0.0
  %1252 = vmatpush1.msra.mxu0 0.0
  %1253 = vmatprep.subr.mxu0 0.0
  %1254 = vmatpush1.msra.mxu0 0.0
  %1255 = vmatprep.subr.mxu0 0.0
  %1256 = vmatpush1.msra.mxu0 0.0
  %1257 = vmatprep.subr.mxu0 0.0
  %1258 = vmatpush1.msra.mxu0 0.0
  %1259 = vmatprep.subr.mxu0 0.0
  %1260 = vmatpush1.msra.mxu0 0.0
  %1261 = vmatprep.mubr.f32.mxu0 0.0
  %1262 = vmatmul.mubr.f32.gmra.mrb[0].mxu0 %v372
  %v1263 = vpop.f32.mrb[0].mxu0
  %v1264 = vadd.f32 0.0, %v1263
  %v1265 = vpop.f32.mrb[0].mxu0
  %1266 = vmatprep.mubr.f32.mxu0 0.0
  %1267 = vmatmul.mubr.f32.gmra.mrb[0].mxu0 %v375
  %v1268 = vpop.f32.mrb[0].mxu0
  %v1269 = vadd.f32 0.0, %v1268
  %v1270 = vpop.f32.mrb[0].mxu0
  %1271 = vdwg.mxu0
  %1272 = vmatprep.subr.mxu0 0.0
  %1273 = vmatpush1.msra.mxu0 %v363
  %1274 = vmatprep.subr.mxu0 0.0
  %1275 = vmatpush1.msra.mxu0 %v368
  %1276 = vmatprep.subr.mxu0 0.0
  %1277 = vmatpush1.msra.mxu0 0.0
  %1278 = vmatprep.subr.mxu0 0.0
  %1279 = vmatpush1.msra.mxu0 0.0
  %1280 = vmatprep.subr.mxu0 0.0
  %1281 = vmatpush1.msra.mxu0 0.0
  %1282 = vmatprep.subr.mxu0 0.0
  %1283 = vmatpush1.msra.mxu0 0.0
  %1284 = vmatprep.subr.mxu0 0.0
  %1285 = vmatpush1.msra.mxu0 0.0
  %1286 = vmatprep.subr.mxu0 0.0
  %1287 = vmatpush1.msra.mxu0 0.0
  %1288 = vmatprep.subr.mxu0 0.0
  %1289 = vmatpush1.msra.mxu0 0.0
  %1290 = vmatprep.subr.mxu0 0.0
  %1291 = vmatpush1.msra.mxu0 0.0
  %1292 = vmatprep.subr.mxu0 0.0
  %1293 = vmatpush1.msra.mxu0 0.0
  %1294 = vmatprep.subr.mxu0 0.0
  %1295 = vmatpush1.msra.mxu0 0.0
  %1296 = vmatprep.subr.mxu0 0.0
  %1297 = vmatpush1.msra.mxu0 0.0
  %1298 = vmatprep.subr.mxu0 0.0
  %1299 = vmatpush1.msra.mxu0 0.0
  %1300 = vmatprep.subr.mxu0 0.0
  %1301 = vmatpush1.msra.mxu0 0.0
  %1302 = vmatprep.subr.mxu0 0.0
  %1303 = vmatpush1.msra.mxu0 0.0
  %1304 = vmatprep.subr.mxu0 0.0
  %1305 = vmatpush1.msra.mxu0 0.0
  %1306 = vmatprep.subr.mxu0 0.0
  %1307 = vmatpush1.msra.mxu0 0.0
  %1308 = vmatprep.subr.mxu0 0.0
  %1309 = vmatpush1.msra.mxu0 0.0
  %1310 = vmatprep.subr.mxu0 0.0
  %1311 = vmatpush1.msra.mxu0 0.0
  %1312 = vmatprep.subr.mxu0 0.0
  %1313 = vmatpush1.msra.mxu0 0.0
  %1314 = vmatprep.subr.mxu0 0.0
  %1315 = vmatpush1.msra.mxu0 0.0
  %1316 = vmatprep.subr.mxu0 0.0
  %1317 = vmatpush1.msra.mxu0 0.0
  %1318 = vmatprep.subr.mxu0 0.0
  %1319 = vmatpush1.msra.mxu0 0.0
  %1320 = vmatprep.subr.mxu0 0.0
  %1321 = vmatpush1.msra.mxu0 0.0
  %1322 = vmatprep.subr.mxu0 0.0
  %1323 = vmatpush1.msra.mxu0 0.0
  %1324 = vmatprep.subr.mxu0 0.0
  %1325 = vmatpush1.msra.mxu0 0.0
  %1326 = vmatprep.subr.mxu0 0.0
  %1327 = vmatpush1.msra.mxu0 0.0
  %1328 = vmatprep.subr.mxu0 0.0
  %1329 = vmatpush1.msra.mxu0 0.0
  %1330 = vmatprep.subr.mxu0 0.0
  %1331 = vmatpush1.msra.mxu0 0.0
  %1332 = vmatprep.subr.mxu0 0.0
  %1333 = vmatpush1.msra.mxu0 0.0
  %1334 = vmatprep.subr.mxu0 0.0
  %1335 = vmatpush1.msra.mxu0 0.0
  %1336 = vmatprep.mubr.f32.mxu0 0.0
  %1337 = vmatmul.mubr.f32.gmra.mrb[0].mxu0 %v372
  %v1338 = vpop.f32.mrb[0].mxu0
  %v1339 = vadd.f32 0.0, %v1338
  %v1340 = vpop.f32.mrb[0].mxu0
  %1341 = vmatprep.mubr.f32.mxu0 0.0
  %1342 = vmatmul.mubr.f32.gmra.mrb[0].mxu0 %v375
  %v1343 = vpop.f32.mrb[0].mxu0
  %v1344 = vadd.f32 0.0, %v1343
  %v1345 = vpop.f32.mrb[0].mxu0
  %1346 = vdwg.mxu0
  %v1347 = vsub.f32 %v46, %v1339
  %v1348 = vsub.f32 %v47, %v1344
  %1349 = vst.msk [vmem:[%s4 + $0x50] sm:$0xff] %vm48, %v1264
  %1350 = vst.msk [vmem:[%s4 + $0x58] sm:$0xff] %vm48, %v1269
  %1351 = vst.msk [vmem:[%s5 + $0x50] sm:$0xff] %vm48, %v1347
  %1352 = vst.msk [vmem:[%s5 + $0x58] sm:$0xff] %vm48, %v1348
  %v1353 = vadd.f32 %v1264, %v1347
  %v1354 = vadd.f32 %v1269, %v1348
  %v1355 = vmax.f32 %v1353, 0.0
  %v1356 = vmax.f32 %v1354, 0.0
  %v1357 = vmin.f32 %v1355, 1.0
  %v1358 = vmin.f32 %v1356, 1.0
  %1359 = vst.msk [vmem:[%s6 + $0x50] sm:$0xff] %vm48, %v1357
  %1360 = vst.msk [vmem:[%s6 + $0x58] sm:$0xff] %vm48, %v1358
  // Predicated region
  $region18: #{tpu_custom_call.1} parent=0 // pred_check
    _
  $region19: #{tpu_custom_call.1} parent=0 // pred_check_branch
    %1362 = sbr.rel (0) target = $region21
  $region20: #{tpu_custom_call.1} parent=0 // pred_region
    _
  $region21: #{tpu_custom_call.1} parent=0 // pred_fallthru
    _
  // Predicated region
  $region22: #{tpu_custom_call.1} parent=0 // pred_check
    _
  $region23: #{tpu_custom_call.1} parent=0 // pred_check_branch
    %1364 = sbr.rel (0) target = $region25
  $region24: #{tpu_custom_call.1} parent=0 // pred_region
    _
  $region25: #{tpu_custom_call.1} parent=0 // pred_fallthru
    _
  // Predicated region
  $region26: #{tpu_custom_call.1} parent=0 // pred_check
    _
  $region27: #{tpu_custom_call.1} parent=0 // pred_check_branch
    %1366 = sbr.rel (0) target = $region29
  $region28: #{tpu_custom_call.1} parent=0 // pred_region
    _
  $region29: #{tpu_custom_call.1} parent=0 // pred_fallthru
    _
  // Predicated region
  $region30: #{tpu_custom_call.1} parent=0 // pred_check
    _
  $region31: #{tpu_custom_call.1} parent=0 // pred_check_branch
    %1368 = sbr.rel (0) target = $region33
  $region32: #{tpu_custom_call.1} parent=0 // pred_region
    _
  $region33: #{tpu_custom_call.1} parent=0 // pred_fallthru
    _
  // Predicated region
  $region34: #{tpu_custom_call.1} parent=0 // pred_check
    _
  $region35: #{tpu_custom_call.1} parent=0 // pred_check_branch
    %1370 = sbr.rel (0) target = $region37
  $region36: #{tpu_custom_call.1} parent=0 // pred_region
    _
  $region37: #{tpu_custom_call.1} parent=0 // pred_fallthru
    _
  // Predicated region
  $region38: #{tpu_custom_call.1} parent=0 // pred_check
    _
  $region39: #{tpu_custom_call.1} parent=0 // pred_check_branch
    %1372 = sbr.rel (0) target = $region41
  $region40: #{tpu_custom_call.1} parent=0 // pred_region
    _
  $region41: #{tpu_custom_call.1} parent=0 // pred_fallthru
    _

</llo_original>
